<compile_context>
chip_gen: v5e
topology: v5e:2x2
jax: 0.10.0
libtpu: 0.0.40
codegen_flags: <defaults>
</compile_context>

<pallas_src>
from functools import partial

import jax
import jax.numpy as jnp
from jax.experimental import pallas as pl
from jax.experimental.pallas import tpu as pltpu

BN_EPS = 1e-5
LANE = 128  # pad the final output width to a multiple of this


def _make_kernel(dims, out_pad):
    """dims = [input_dim, l1, l2, l3, l4, output_dim] (static Python ints)."""
    out_dims = list(dims[1:5]) + [out_pad]  # output width of fc1..fc5 (fc5 padded)

    def kernel(x_ref, w1_ref, w2_ref, w3_ref, w4_ref, w5_ref, vec_ref, o_ref):
        w_refs = (w1_ref, w2_ref, w3_ref, w4_ref, w5_ref)
        # Packed slab layout (fp32, rows padded to max width):
        #   row 0     -> b5 (zero-padded to out_pad lanes)
        #   rows 1..4 -> gamma1..gamma4
        #   rows 5..8 -> beta1..beta4

        def matmul(h, layer):
            # bf16 x bf16 on the MXU, fp32 accumulation.
            w = w_refs[layer][...]                       # bf16 [in, out]
            return jnp.dot(h.astype(jnp.bfloat16), w,
                           preferred_element_type=jnp.float32)

        def bn_relu(h, layer):
            # NOTE: the fcK bias is omitted for layers 1..4 — it is exactly
            # cancelled by the training-mode batch-mean subtraction below.
            d = out_dims[layer]
            g = vec_ref[1 + layer:2 + layer, :d]         # (1, d) fp32
            beta = vec_ref[5 + layer:6 + layer, :d]      # (1, d) fp32
            inv_n = 1.0 / h.shape[0]
            mean = jnp.sum(h, axis=0, keepdims=True) * inv_n
            c = h - mean                                 # two-pass statistics
            var = jnp.sum(c * c, axis=0, keepdims=True) * inv_n
            scale = g * jax.lax.rsqrt(var + BN_EPS)      # fold BN affine into FMA
            return jnp.maximum(c * scale + beta, 0.0)

        h = x_ref[...]                                   # dropout1 (p=0) = identity, bf16
        for layer in range(4):                           # fc1..fc4 + bn + relu
            h = bn_relu(matmul(h, layer), layer)
        b5 = vec_ref[0:1, :out_pad]                      # (1, out_pad) fp32
        o_ref[...] = matmul(h, 4) + b5                   # fc5 (no bn / relu)

    return kernel


def prepare_params(params):
    """One-time parameter prep (do NOT call per forward).

    Returns (prepared_dict, out_dim): bf16 weights (W5 zero-padded to a
    lane-dense width) plus the packed [9, width] fp32 vector slab.
    """
    dims = [params["W1"].shape[0]] + [params[f"W{i}"].shape[1] for i in range(1, 6)]
    out_dim = dims[5]
    out_pad = max(LANE, pl.cdiv(out_dim, LANE) * LANE)
    width = max(dims[1:5] + [out_pad])

    prepared = {f"W{i}": params[f"W{i}"].astype(jnp.bfloat16) for i in range(1, 5)}
    prepared["W5"] = jnp.pad(
        params["W5"], ((0, 0), (0, out_pad - out_dim))).astype(jnp.bfloat16)

    rows = [jnp.pad(params["b5"].reshape(-1).astype(jnp.float32),
                    (0, width - out_dim))]
    for name in ("g", "beta"):
        for i in range(4):
            v = params[f"{name}{i + 1}"].reshape(-1).astype(jnp.float32)
            rows.append(jnp.pad(v, (0, width - dims[i + 1])))
    prepared["vec"] = jnp.stack(rows)                    # [9, width] fp32
    return prepared, out_dim


@partial(jax.jit, static_argnames=("out_dim",))
def mlp_head_forward(x, prepared, out_dim):
    """x: [batch, input_dim] fp32 (or bf16). prepared: output of prepare_params."""
    dims = [prepared["W1"].shape[0]] + [prepared[f"W{i}"].shape[1] for i in range(1, 5)]
    out_pad = prepared["W5"].shape[1]
    dims = dims + [out_dim]
    batch = x.shape[0]

    vmem = pl.BlockSpec(memory_space=pltpu.MemorySpace.VMEM)
    padded_out = pl.pallas_call(
        _make_kernel(dims, out_pad),
        out_shape=jax.ShapeDtypeStruct((batch, out_pad), jnp.float32),
        in_specs=[vmem] * 7,
        out_specs=vmem,
    )(x.astype(jnp.bfloat16),
      prepared["W1"], prepared["W2"], prepared["W3"], prepared["W4"], prepared["W5"],
      prepared["vec"])
    return padded_out[:, :out_dim]


def _make_params(key, input_dim, output_dim, l1=512, l2=256, l3=128, l4=64):
    dims = [input_dim, l1, l2, l3, l4, output_dim]
    params = {}
    keys = jax.random.split(key, 10)
    for i in range(5):
        fan_in, fan_out = dims[i], dims[i + 1]
        w = jax.random.normal(keys[2 * i], (fan_in, fan_out), jnp.float32) * (1.0 / jnp.sqrt(fan_in))
        b = jax.random.normal(keys[2 * i + 1], (1, fan_out), jnp.float32) * 0.01
        params[f"W{i + 1}"] = w
        params[f"b{i + 1}"] = b
        if i < 4:
            # BatchNorm affine params (PyTorch default: gamma=1, beta=0).
            params[f"g{i + 1}"] = jnp.ones((1, fan_out), jnp.float32)
            params[f"beta{i + 1}"] = jnp.zeros((1, fan_out), jnp.float32)
    return params


def _reference_forward(x, params):
    """Pure-JAX reference mirroring the module (WITH b1..b4) and the kernel's
    bf16-matmul / fp32-BN split — checks that dropping b1..b4 in-kernel is
    semantics-preserving."""
    h = x
    for i in range(1, 5):
        w = params[f"W{i}"].astype(jnp.bfloat16)
        h = jnp.dot(h.astype(jnp.bfloat16), w,
                    preferred_element_type=jnp.float32) + params[f"b{i}"]
        mean = jnp.mean(h, axis=0, keepdims=True)
        var = jnp.mean((h - mean) ** 2, axis=0, keepdims=True)
        h = (h - mean) / jnp.sqrt(var + BN_EPS)
        h = h * params[f"g{i}"] + params[f"beta{i}"]
        h = jnp.maximum(h, 0.0)
    w5 = params["W5"].astype(jnp.bfloat16)
    return jnp.dot(h.astype(jnp.bfloat16), w5,
                   preferred_element_type=jnp.float32) + params["b5"]


if __name__ == "__main__":
    key = jax.random.PRNGKey(0)
    k_x, k_p = jax.random.split(key)

    batch, input_dim, output_dim = 8, 256, 16
    x = jax.random.normal(k_x, (batch, input_dim), jnp.float32)
    params = _make_params(k_p, input_dim, output_dim)

    prepared, out_dim = prepare_params(params)           # one-time prep (cached)

    out = mlp_head_forward(x, prepared, out_dim)
    out = jax.block_until_ready(out)

    ref = _reference_forward(x, params)
    assert out.shape == (batch, output_dim)
    assert bool(jnp.allclose(out, ref, atol=2e-2, rtol=2e-2)), "mismatch vs JAX reference"

    print("KERNEL_OK")
</pallas_src>

<mosaic_0001>
module attributes {stable_mosaic.version = 11 : i64} {
  func.func @kernel(%arg0: memref<8x256xbf16, #tpu.memory_space<vmem>>, %arg1: memref<256x512xbf16, #tpu.memory_space<vmem>>, %arg2: memref<512x256xbf16, #tpu.memory_space<vmem>>, %arg3: memref<256x128xbf16, #tpu.memory_space<vmem>>, %arg4: memref<128x64xbf16, #tpu.memory_space<vmem>>, %arg5: memref<64x128xbf16, #tpu.memory_space<vmem>>, %arg6: memref<9x512xf32, #tpu.memory_space<vmem>>, %arg7: memref<8x128xf32, #tpu.memory_space<vmem>>) attributes {dimension_semantics = [], scalar_prefetch = 0 : i64, scratch_operands = 0 : i64, tpu.core_type = #tpu.core_type<tc>} {
    %c0 = arith.constant 0 : index
    %c0_0 = arith.constant 0 : index
    %0 = vector.load %arg0[%c0, %c0_0] : memref<8x256xbf16, #tpu.memory_space<vmem>>, vector<8x256xbf16>
    %c0_1 = arith.constant 0 : index
    %c0_2 = arith.constant 0 : index
    %1 = vector.load %arg1[%c0_1, %c0_2] : memref<256x512xbf16, #tpu.memory_space<vmem>>, vector<256x512xbf16>
    %cst = arith.constant dense<0.000000e+00> : vector<8x512xf32>
    %2 = tpu.matmul %0, %1, %cst {dimension_numbers = #tpu.dot_dimension_numbers<[1], [0], [0], [1], [0, 0, 1, 1], [], []>} : vector<8x256xbf16>, vector<256x512xbf16>, vector<8x512xf32> -> vector<8x512xf32>
    %c1 = arith.constant 1 : index
    %c0_3 = arith.constant 0 : index
    %3 = vector.load %arg6[%c1, %c0_3] : memref<9x512xf32, #tpu.memory_space<vmem>>, vector<1x512xf32>
    %c5 = arith.constant 5 : index
    %c0_4 = arith.constant 0 : index
    %4 = vector.load %arg6[%c5, %c0_4] : memref<9x512xf32, #tpu.memory_space<vmem>>, vector<1x512xf32>
    %cst_5 = arith.constant dense<0.000000e+00> : vector<512xf32>
    %5 = vector.multi_reduction <add>, %2, %cst_5 [0] : vector<8x512xf32> to vector<512xf32>
    %6 = vector.shape_cast %5 : vector<512xf32> to vector<1x512xf32>
    %cst_6 = arith.constant 1.250000e-01 : f32
    %7 = vector.broadcast %cst_6 : f32 to vector<1x512xf32>
    %8 = arith.mulf %6, %7 : vector<1x512xf32>
    %9 = vector.broadcast %8 : vector<1x512xf32> to vector<8x512xf32>
    %10 = arith.subf %2, %9 : vector<8x512xf32>
    %11 = arith.mulf %10, %10 : vector<8x512xf32>
    %cst_7 = arith.constant dense<0.000000e+00> : vector<512xf32>
    %12 = vector.multi_reduction <add>, %11, %cst_7 [0] : vector<8x512xf32> to vector<512xf32>
    %13 = vector.shape_cast %12 : vector<512xf32> to vector<1x512xf32>
    %cst_8 = arith.constant 1.250000e-01 : f32
    %14 = vector.broadcast %cst_8 : f32 to vector<1x512xf32>
    %15 = arith.mulf %13, %14 : vector<1x512xf32>
    %cst_9 = arith.constant 9.99999974E-6 : f32
    %16 = vector.broadcast %cst_9 : f32 to vector<1x512xf32>
    %17 = arith.addf %15, %16 : vector<1x512xf32>
    %18 = math.rsqrt %17 : vector<1x512xf32>
    %19 = arith.mulf %3, %18 : vector<1x512xf32>
    %20 = vector.broadcast %19 : vector<1x512xf32> to vector<8x512xf32>
    %21 = arith.mulf %10, %20 : vector<8x512xf32>
    %22 = vector.broadcast %4 : vector<1x512xf32> to vector<8x512xf32>
    %23 = arith.addf %21, %22 : vector<8x512xf32>
    %cst_10 = arith.constant 0.000000e+00 : f32
    %24 = vector.broadcast %cst_10 : f32 to vector<8x512xf32>
    %25 = arith.maximumf %23, %24 : vector<8x512xf32>
    %c0_11 = arith.constant 0 : index
    %c0_12 = arith.constant 0 : index
    %26 = vector.load %arg2[%c0_11, %c0_12] : memref<512x256xbf16, #tpu.memory_space<vmem>>, vector<512x256xbf16>
    %27 = arith.truncf %25 : vector<8x512xf32> to vector<8x512xbf16>
    %cst_13 = arith.constant dense<0.000000e+00> : vector<8x256xf32>
    %28 = tpu.matmul %27, %26, %cst_13 {dimension_numbers = #tpu.dot_dimension_numbers<[1], [0], [0], [1], [0, 0, 1, 1], [], []>} : vector<8x512xbf16>, vector<512x256xbf16>, vector<8x256xf32> -> vector<8x256xf32>
    %c2 = arith.constant 2 : index
    %c0_14 = arith.constant 0 : index
    %29 = vector.load %arg6[%c2, %c0_14] : memref<9x512xf32, #tpu.memory_space<vmem>>, vector<1x256xf32>
    %c6 = arith.constant 6 : index
    %c0_15 = arith.constant 0 : index
    %30 = vector.load %arg6[%c6, %c0_15] : memref<9x512xf32, #tpu.memory_space<vmem>>, vector<1x256xf32>
    %cst_16 = arith.constant dense<0.000000e+00> : vector<256xf32>
    %31 = vector.multi_reduction <add>, %28, %cst_16 [0] : vector<8x256xf32> to vector<256xf32>
    %32 = vector.shape_cast %31 : vector<256xf32> to vector<1x256xf32>
    %cst_17 = arith.constant 1.250000e-01 : f32
    %33 = vector.broadcast %cst_17 : f32 to vector<1x256xf32>
    %34 = arith.mulf %32, %33 : vector<1x256xf32>
    %35 = vector.broadcast %34 : vector<1x256xf32> to vector<8x256xf32>
    %36 = arith.subf %28, %35 : vector<8x256xf32>
    %37 = arith.mulf %36, %36 : vector<8x256xf32>
    %cst_18 = arith.constant dense<0.000000e+00> : vector<256xf32>
    %38 = vector.multi_reduction <add>, %37, %cst_18 [0] : vector<8x256xf32> to vector<256xf32>
    %39 = vector.shape_cast %38 : vector<256xf32> to vector<1x256xf32>
    %cst_19 = arith.constant 1.250000e-01 : f32
    %40 = vector.broadcast %cst_19 : f32 to vector<1x256xf32>
    %41 = arith.mulf %39, %40 : vector<1x256xf32>
    %cst_20 = arith.constant 9.99999974E-6 : f32
    %42 = vector.broadcast %cst_20 : f32 to vector<1x256xf32>
    %43 = arith.addf %41, %42 : vector<1x256xf32>
    %44 = math.rsqrt %43 : vector<1x256xf32>
    %45 = arith.mulf %29, %44 : vector<1x256xf32>
    %46 = vector.broadcast %45 : vector<1x256xf32> to vector<8x256xf32>
    %47 = arith.mulf %36, %46 : vector<8x256xf32>
    %48 = vector.broadcast %30 : vector<1x256xf32> to vector<8x256xf32>
    %49 = arith.addf %47, %48 : vector<8x256xf32>
    %cst_21 = arith.constant 0.000000e+00 : f32
    %50 = vector.broadcast %cst_21 : f32 to vector<8x256xf32>
    %51 = arith.maximumf %49, %50 : vector<8x256xf32>
    %c0_22 = arith.constant 0 : index
    %c0_23 = arith.constant 0 : index
    %52 = vector.load %arg3[%c0_22, %c0_23] : memref<256x128xbf16, #tpu.memory_space<vmem>>, vector<256x128xbf16>
    %53 = arith.truncf %51 : vector<8x256xf32> to vector<8x256xbf16>
    %cst_24 = arith.constant dense<0.000000e+00> : vector<8x128xf32>
    %54 = tpu.matmul %53, %52, %cst_24 {dimension_numbers = #tpu.dot_dimension_numbers<[1], [0], [0], [1], [0, 0, 1, 1], [], []>} : vector<8x256xbf16>, vector<256x128xbf16>, vector<8x128xf32> -> vector<8x128xf32>
    %c3 = arith.constant 3 : index
    %c0_25 = arith.constant 0 : index
    %55 = vector.load %arg6[%c3, %c0_25] : memref<9x512xf32, #tpu.memory_space<vmem>>, vector<1x128xf32>
    %c7 = arith.constant 7 : index
    %c0_26 = arith.constant 0 : index
    %56 = vector.load %arg6[%c7, %c0_26] : memref<9x512xf32, #tpu.memory_space<vmem>>, vector<1x128xf32>
    %cst_27 = arith.constant dense<0.000000e+00> : vector<128xf32>
    %57 = vector.multi_reduction <add>, %54, %cst_27 [0] : vector<8x128xf32> to vector<128xf32>
    %58 = vector.shape_cast %57 : vector<128xf32> to vector<1x128xf32>
    %cst_28 = arith.constant 1.250000e-01 : f32
    %59 = vector.broadcast %cst_28 : f32 to vector<1x128xf32>
    %60 = arith.mulf %58, %59 : vector<1x128xf32>
    %61 = vector.broadcast %60 : vector<1x128xf32> to vector<8x128xf32>
    %62 = arith.subf %54, %61 : vector<8x128xf32>
    %63 = arith.mulf %62, %62 : vector<8x128xf32>
    %cst_29 = arith.constant dense<0.000000e+00> : vector<128xf32>
    %64 = vector.multi_reduction <add>, %63, %cst_29 [0] : vector<8x128xf32> to vector<128xf32>
    %65 = vector.shape_cast %64 : vector<128xf32> to vector<1x128xf32>
    %cst_30 = arith.constant 1.250000e-01 : f32
    %66 = vector.broadcast %cst_30 : f32 to vector<1x128xf32>
    %67 = arith.mulf %65, %66 : vector<1x128xf32>
    %cst_31 = arith.constant 9.99999974E-6 : f32
    %68 = vector.broadcast %cst_31 : f32 to vector<1x128xf32>
    %69 = arith.addf %67, %68 : vector<1x128xf32>
    %70 = math.rsqrt %69 : vector<1x128xf32>
    %71 = arith.mulf %55, %70 : vector<1x128xf32>
    %72 = vector.broadcast %71 : vector<1x128xf32> to vector<8x128xf32>
    %73 = arith.mulf %62, %72 : vector<8x128xf32>
    %74 = vector.broadcast %56 : vector<1x128xf32> to vector<8x128xf32>
    %75 = arith.addf %73, %74 : vector<8x128xf32>
    %cst_32 = arith.constant 0.000000e+00 : f32
    %76 = vector.broadcast %cst_32 : f32 to vector<8x128xf32>
    %77 = arith.maximumf %75, %76 : vector<8x128xf32>
    %c0_33 = arith.constant 0 : index
    %c0_34 = arith.constant 0 : index
    %78 = vector.load %arg4[%c0_33, %c0_34] : memref<128x64xbf16, #tpu.memory_space<vmem>>, vector<128x64xbf16>
    %79 = arith.truncf %77 : vector<8x128xf32> to vector<8x128xbf16>
    %cst_35 = arith.constant dense<0.000000e+00> : vector<8x64xf32>
    %80 = tpu.matmul %79, %78, %cst_35 {dimension_numbers = #tpu.dot_dimension_numbers<[1], [0], [0], [1], [0, 0, 1, 1], [], []>} : vector<8x128xbf16>, vector<128x64xbf16>, vector<8x64xf32> -> vector<8x64xf32>
    %c4 = arith.constant 4 : index
    %c0_36 = arith.constant 0 : index
    %81 = vector.load %arg6[%c4, %c0_36] : memref<9x512xf32, #tpu.memory_space<vmem>>, vector<1x64xf32>
    %c8 = arith.constant 8 : index
    %c0_37 = arith.constant 0 : index
    %82 = vector.load %arg6[%c8, %c0_37] : memref<9x512xf32, #tpu.memory_space<vmem>>, vector<1x64xf32>
    %cst_38 = arith.constant dense<0.000000e+00> : vector<64xf32>
    %83 = vector.multi_reduction <add>, %80, %cst_38 [0] : vector<8x64xf32> to vector<64xf32>
    %84 = vector.shape_cast %83 : vector<64xf32> to vector<1x64xf32>
    %cst_39 = arith.constant 1.250000e-01 : f32
    %85 = vector.broadcast %cst_39 : f32 to vector<1x64xf32>
    %86 = arith.mulf %84, %85 : vector<1x64xf32>
    %87 = vector.broadcast %86 : vector<1x64xf32> to vector<8x64xf32>
    %88 = arith.subf %80, %87 : vector<8x64xf32>
    %89 = arith.mulf %88, %88 : vector<8x64xf32>
    %cst_40 = arith.constant dense<0.000000e+00> : vector<64xf32>
    %90 = vector.multi_reduction <add>, %89, %cst_40 [0] : vector<8x64xf32> to vector<64xf32>
    %91 = vector.shape_cast %90 : vector<64xf32> to vector<1x64xf32>
    %cst_41 = arith.constant 1.250000e-01 : f32
    %92 = vector.broadcast %cst_41 : f32 to vector<1x64xf32>
    %93 = arith.mulf %91, %92 : vector<1x64xf32>
    %cst_42 = arith.constant 9.99999974E-6 : f32
    %94 = vector.broadcast %cst_42 : f32 to vector<1x64xf32>
    %95 = arith.addf %93, %94 : vector<1x64xf32>
    %96 = math.rsqrt %95 : vector<1x64xf32>
    %97 = arith.mulf %81, %96 : vector<1x64xf32>
    %98 = vector.broadcast %97 : vector<1x64xf32> to vector<8x64xf32>
    %99 = arith.mulf %88, %98 : vector<8x64xf32>
    %100 = vector.broadcast %82 : vector<1x64xf32> to vector<8x64xf32>
    %101 = arith.addf %99, %100 : vector<8x64xf32>
    %cst_43 = arith.constant 0.000000e+00 : f32
    %102 = vector.broadcast %cst_43 : f32 to vector<8x64xf32>
    %103 = arith.maximumf %101, %102 : vector<8x64xf32>
    %c0_44 = arith.constant 0 : index
    %c0_45 = arith.constant 0 : index
    %104 = vector.load %arg6[%c0_44, %c0_45] : memref<9x512xf32, #tpu.memory_space<vmem>>, vector<1x128xf32>
    %c0_46 = arith.constant 0 : index
    %c0_47 = arith.constant 0 : index
    %105 = vector.load %arg5[%c0_46, %c0_47] : memref<64x128xbf16, #tpu.memory_space<vmem>>, vector<64x128xbf16>
    %106 = arith.truncf %103 : vector<8x64xf32> to vector<8x64xbf16>
    %cst_48 = arith.constant dense<0.000000e+00> : vector<8x128xf32>
    %107 = tpu.matmul %106, %105, %cst_48 {dimension_numbers = #tpu.dot_dimension_numbers<[1], [0], [0], [1], [0, 0, 1, 1], [], []>} : vector<8x64xbf16>, vector<64x128xbf16>, vector<8x128xf32> -> vector<8x128xf32>
    %108 = vector.broadcast %104 : vector<1x128xf32> to vector<8x128xf32>
    %109 = arith.addf %107, %108 : vector<8x128xf32>
    %c0_49 = arith.constant 0 : index
    %c0_50 = arith.constant 0 : index
    %110 = vector.load %arg7[%c0_49, %c0_50] : memref<8x128xf32, #tpu.memory_space<vmem>>, vector<8x128xf32>
    tpu.vector_store %arg7[%c0_49, %c0_50], %109 {strides = array<i32>} : memref<8x128xf32, #tpu.memory_space<vmem>>, vector<8x128xf32>,
    return
  }
}

</mosaic_0001>

<llo_original>
// kernel: mlp_head_forward.1
$region0: #{mlp_head_forward.1}
  #allocation0 [shape = 'u32[]', space=smem, size = 0x4, offset = 0x4, fixed_abs, tag = 'smem constant byte address 0x4 - core index']
  #allocation1 [shape = 'u32[72,128]{1,0:T(1,128)}', space=vmem, size = 0x9000, scoped, tag = 'internal scratch']
  %s0 = inlined_call_operand.vmem [shape: bf16[8,256], index: 0, kind: input, shape index: {}]
  %s1 = inlined_call_operand.hbm [shape: bf16[256,512], index: 1, kind: input, shape index: {}]
  %s2 = inlined_call_operand.hbm [shape: bf16[512,256], index: 2, kind: input, shape index: {}]
  %s3 = inlined_call_operand.hbm [shape: bf16[256,128], index: 3, kind: input, shape index: {}]
  %s4 = inlined_call_operand.vmem [shape: bf16[128,64], index: 4, kind: input, shape index: {}]
  %s5 = inlined_call_operand.vmem [shape: bf16[64,128], index: 5, kind: input, shape index: {}]
  %s6 = inlined_call_operand.vmem [shape: f32[9,512], index: 6, kind: input, shape index: {}]
  %s7 = inlined_call_operand.hbm [shape: f32[8,128], index: 7, kind: output, shape index: {}]
  %s8 = sld [smem:[#allocation0]]
  $region50: #{mlp_head_forward.1} parent=0
    _
  %s10 = ssub.s32 1, %s8
  %s11 = scalar_select 0, %s10, %s8
  $region1: #{mlp_head_forward.1} parent=0
    #allocation2 [shape = 'u8[262144]{0}', space=vmem, size = 0x40000, scoped, tag = 'input window, operand 1, single buffered']
    #allocation3 [shape = 's32[1]{0}', space=sflag, size = 0x4, scoped, tag = 'scoped memory for mlp_head_forward.1']
    #allocation4 [shape = 's32[1]{0}', space=sflag, size = 0x4, scoped, tag = 'scoped memory for mlp_head_forward.1']
    #allocation5 [shape = 'u8[262144]{0}', space=vmem, size = 0x40000, scoped, tag = 'input window, operand 2, single buffered']
    #allocation6 [shape = 's32[1]{0}', space=sflag, size = 0x4, scoped, tag = 'scoped memory for mlp_head_forward.1']
    #allocation7 [shape = 'u8[65536]{0}', space=vmem, size = 0x10000, scoped, tag = 'input window, operand 3, single buffered']
    #allocation8 [shape = 'u8[4096]{0}', space=vmem, size = 0x1000, scoped, tag = 'output window, operand 0, single buffered']
    %12 = vsyncpa [#allocation3], 0
    %13 = vsyncpa [#allocation6], 0
    %14 = vsyncpa [#allocation4], 0
    // Predicated region
    $region2: #{mlp_head_forward.1} parent=1 // pred_check
      _
    $region3: #{mlp_head_forward.1} parent=1 // pred_check_branch
      %16 = sbr.rel (0) target = $region5
    $region4: #{mlp_head_forward.1} parent=1 // pred_region
      _
    $region5: #{mlp_head_forward.1} parent=1 // pred_fallthru
      _
    // Predicated region
    $region6: #{mlp_head_forward.1} parent=1 // pred_check
      _
    $region7: #{mlp_head_forward.1} parent=1 // pred_check_branch
      %18 = sbr.rel (0) target = $region9
    $region8: #{mlp_head_forward.1} parent=1 // pred_region
      %20 = vsyncadd [#allocation3], 0
      %s21 = sshll.u32 %s1, 4
      %s22 = int_to_ptr.hbm [resolvable:$true] %s21
      %s23 = sshll.u32 [#allocation2], 4
      %s24 = int_to_ptr.vmem [resolvable:$true] %s23
      %29 = dma.hbm_to_vmem [thread:$0]  %s22, 8192, %s24, [#allocation3], 256, 256, 16
    $region9: #{mlp_head_forward.1} parent=1 // pred_fallthru
      _
    // Predicated region
    $region10: #{mlp_head_forward.1} parent=1 // pred_check
      _
    $region11: #{mlp_head_forward.1} parent=1 // pred_check_branch
      %31 = sbr.rel (0) target = $region13
    $region12: #{mlp_head_forward.1} parent=1 // pred_region
      %33 = vsyncadd [#allocation6], 0
      %s34 = sshll.u32 %s2, 4
      %s35 = int_to_ptr.hbm [resolvable:$true] %s34
      %s36 = sshll.u32 [#allocation5], 4
      %s37 = int_to_ptr.vmem [resolvable:$true] %s36
      %42 = dma.hbm_to_vmem [thread:$0]  %s35, 8192, %s37, [#allocation6], 128, 128, 8
    $region13: #{mlp_head_forward.1} parent=1 // pred_fallthru
      _
    // Predicated region
    $region14: #{mlp_head_forward.1} parent=1 // pred_check
      _
    $region15: #{mlp_head_forward.1} parent=1 // pred_check_branch
      %44 = sbr.rel (0) target = $region17
    $region16: #{mlp_head_forward.1} parent=1 // pred_region
      %46 = vsyncadd [#allocation6], 0
      %s47 = sshll.u32 %s3, 4
      %s48 = int_to_ptr.hbm [resolvable:$true] %s47
      %s49 = sshll.u32 [#allocation7], 4
      %s50 = int_to_ptr.vmem [resolvable:$true] %s49
      %55 = dma.hbm_to_vmem [thread:$0]  %s48, 2048, %s50, [#allocation6], 64, 64, 4
    $region17: #{mlp_head_forward.1} parent=1 // pred_fallthru
      _
    // Predicated region
    $region18: #{mlp_head_forward.1} parent=1 // pred_check
      _
    $region19: #{mlp_head_forward.1} parent=1 // pred_check_branch
      %57 = sbr.rel (0) target = $region21
    $region20: #{mlp_head_forward.1} parent=1 // pred_region
      _
    $region21: #{mlp_head_forward.1} parent=1 // pred_fallthru
      _
    // Predicated region
    $region22: #{mlp_head_forward.1} parent=1 // pred_check
      _
    $region23: #{mlp_head_forward.1} parent=1 // pred_check_branch
      %59 = sbr.rel (0) target = $region25
    $region24: #{mlp_head_forward.1} parent=1 // pred_region
      _
    $region25: #{mlp_head_forward.1} parent=1 // pred_fallthru
      _
    // Predicated region
    $region26: #{mlp_head_forward.1} parent=1 // pred_check
      _
    $region27: #{mlp_head_forward.1} parent=1 // pred_check_branch
      %61 = sbr.rel (0) target = $region29
    $region28: #{mlp_head_forward.1} parent=1 // pred_region
      _
    $region29: #{mlp_head_forward.1} parent=1 // pred_fallthru
      _
    // Predicated region
    $region30: #{mlp_head_forward.1} parent=1 // pred_check
      _
    $region31: #{mlp_head_forward.1} parent=1 // pred_check_branch
      %63 = sbr.rel (0) target = $region33
    $region32: #{mlp_head_forward.1} parent=1 // pred_region
      %65 = dma.done [#allocation3], 8192
    $region33: #{mlp_head_forward.1} parent=1 // pred_fallthru
      _
    // Predicated region
    $region34: #{mlp_head_forward.1} parent=1 // pred_check
      _
    $region35: #{mlp_head_forward.1} parent=1 // pred_check_branch
      %67 = sbr.rel (0) target = $region37
    $region36: #{mlp_head_forward.1} parent=1 // pred_region
      %69 = dma.done [#allocation6], 8192
    $region37: #{mlp_head_forward.1} parent=1 // pred_fallthru
      _
    // Predicated region
    $region38: #{mlp_head_forward.1} parent=1 // pred_check
      _
    $region39: #{mlp_head_forward.1} parent=1 // pred_check_branch
      %71 = sbr.rel (0) target = $region41
    $region40: #{mlp_head_forward.1} parent=1 // pred_region
      %73 = dma.done [#allocation6], 2048
    $region41: #{mlp_head_forward.1} parent=1 // pred_fallthru
      _
    %v75 = vld [vmem:[%s0] sm:$0xff]
    %v76 = vld [vmem:[#allocation2] sm:$0xff]
    %v77 = vld [vmem:[#allocation2 + $0x8] sm:$0xff]
    %v78 = vld [vmem:[#allocation2 + $0x10] sm:$0xff]
    %v79 = vld [vmem:[#allocation2 + $0x18] sm:$0xff]
    %v80 = vld [vmem:[#allocation2 + $0x20] sm:$0xff]
    %v81 = vld [vmem:[#allocation2 + $0x28] sm:$0xff]
    %v82 = vld [vmem:[#allocation2 + $0x30] sm:$0xff]
    %v83 = vld [vmem:[#allocation2 + $0x38] sm:$0xff]
    %v84 = vld [vmem:[#allocation2 + $0x40] sm:$0xff]
    %v85 = vld [vmem:[#allocation2 + $0x48] sm:$0xff]
    %v86 = vld [vmem:[#allocation2 + $0x50] sm:$0xff]
    %v87 = vld [vmem:[#allocation2 + $0x58] sm:$0xff]
    %v88 = vld [vmem:[#allocation2 + $0x60] sm:$0xff]
    %v89 = vld [vmem:[#allocation2 + $0x68] sm:$0xff]
    %v90 = vld [vmem:[#allocation2 + $0x70] sm:$0xff]
    %v91 = vld [vmem:[#allocation2 + $0x78] sm:$0xff]
    %v92 = vld [vmem:[#allocation2 + $0x80] sm:$0xff]
    %v93 = vld [vmem:[#allocation2 + $0x88] sm:$0xff]
    %v94 = vld [vmem:[#allocation2 + $0x90] sm:$0xff]
    %v95 = vld [vmem:[#allocation2 + $0x98] sm:$0xff]
    %v96 = vld [vmem:[#allocation2 + $0xa0] sm:$0xff]
    %v97 = vld [vmem:[#allocation2 + $0xa8] sm:$0xff]
    %v98 = vld [vmem:[#allocation2 + $0xb0] sm:$0xff]
    %v99 = vld [vmem:[#allocation2 + $0xb8] sm:$0xff]
    %v100 = vld [vmem:[#allocation2 + $0xc0] sm:$0xff]
    %v101 = vld [vmem:[#allocation2 + $0xc8] sm:$0xff]
    %v102 = vld [vmem:[#allocation2 + $0xd0] sm:$0xff]
    %v103 = vld [vmem:[#allocation2 + $0xd8] sm:$0xff]
    %v104 = vld [vmem:[#allocation2 + $0xe0] sm:$0xff]
    %v105 = vld [vmem:[#allocation2 + $0xe8] sm:$0xff]
    %v106 = vld [vmem:[#allocation2 + $0xf0] sm:$0xff]
    %v107 = vld [vmem:[#allocation2 + $0xf8] sm:$0xff]
    %v108 = vld [vmem:[#allocation2 + $0x100] sm:$0xff]
    %v109 = vld [vmem:[#allocation2 + $0x108] sm:$0xff]
    %v110 = vld [vmem:[#allocation2 + $0x110] sm:$0xff]
    %v111 = vld [vmem:[#allocation2 + $0x118] sm:$0xff]
    %v112 = vld [vmem:[#allocation2 + $0x120] sm:$0xff]
    %v113 = vld [vmem:[#allocation2 + $0x128] sm:$0xff]
    %v114 = vld [vmem:[#allocation2 + $0x130] sm:$0xff]
    %v115 = vld [vmem:[#allocation2 + $0x138] sm:$0xff]
    %v116 = vld [vmem:[#allocation2 + $0x140] sm:$0xff]
    %v117 = vld [vmem:[#allocation2 + $0x148] sm:$0xff]
    %v118 = vld [vmem:[#allocation2 + $0x150] sm:$0xff]
    %v119 = vld [vmem:[#allocation2 + $0x158] sm:$0xff]
    %v120 = vld [vmem:[#allocation2 + $0x160] sm:$0xff]
    %v121 = vld [vmem:[#allocation2 + $0x168] sm:$0xff]
    %v122 = vld [vmem:[#allocation2 + $0x170] sm:$0xff]
    %v123 = vld [vmem:[#allocation2 + $0x178] sm:$0xff]
    %v124 = vld [vmem:[#allocation2 + $0x180] sm:$0xff]
    %v125 = vld [vmem:[#allocation2 + $0x188] sm:$0xff]
    %v126 = vld [vmem:[#allocation2 + $0x190] sm:$0xff]
    %v127 = vld [vmem:[#allocation2 + $0x198] sm:$0xff]
    %v128 = vld [vmem:[#allocation2 + $0x1a0] sm:$0xff]
    %v129 = vld [vmem:[#allocation2 + $0x1a8] sm:$0xff]
    %v130 = vld [vmem:[#allocation2 + $0x1b0] sm:$0xff]
    %v131 = vld [vmem:[#allocation2 + $0x1b8] sm:$0xff]
    %v132 = vld [vmem:[#allocation2 + $0x1c0] sm:$0xff]
    %v133 = vld [vmem:[#allocation2 + $0x1c8] sm:$0xff]
    %v134 = vld [vmem:[#allocation2 + $0x1d0] sm:$0xff]
    %v135 = vld [vmem:[#allocation2 + $0x1d8] sm:$0xff]
    %v136 = vld [vmem:[#allocation2 + $0x1e0] sm:$0xff]
    %v137 = vld [vmem:[#allocation2 + $0x1e8] sm:$0xff]
    %v138 = vld [vmem:[#allocation2 + $0x1f0] sm:$0xff]
    %v139 = vld [vmem:[#allocation2 + $0x1f8] sm:$0xff]
    %v141 = vunpack.c.l.b16 %v75
    %v142 = vunpack.c.h.b16 %v75
    %v143 = vpack.c.b16 %v141, %v141
    %v144 = vpack.c.b16 %v142, %v142
    %v211 = vunpack.c.l.b16 %v76
    %v212 = vunpack.c.h.b16 %v76
    %v213 = vunpack.c.l.b16 %v77
    %v214 = vunpack.c.h.b16 %v77
    %v215 = vunpack.c.l.b16 %v78
    %v216 = vunpack.c.h.b16 %v78
    %v217 = vunpack.c.l.b16 %v79
    %v218 = vunpack.c.h.b16 %v79
    %v219 = vunpack.c.l.b16 %v80
    %v220 = vunpack.c.h.b16 %v80
    %v221 = vunpack.c.l.b16 %v81
    %v222 = vunpack.c.h.b16 %v81
    %v223 = vunpack.c.l.b16 %v82
    %v224 = vunpack.c.h.b16 %v82
    %v225 = vunpack.c.l.b16 %v83
    %v226 = vunpack.c.h.b16 %v83
    %v227 = vunpack.c.l.b16 %v84
    %v228 = vunpack.c.h.b16 %v84
    %v229 = vunpack.c.l.b16 %v85
    %v230 = vunpack.c.h.b16 %v85
    %v231 = vunpack.c.l.b16 %v86
    %v232 = vunpack.c.h.b16 %v86
    %v233 = vunpack.c.l.b16 %v87
    %v234 = vunpack.c.h.b16 %v87
    %v235 = vunpack.c.l.b16 %v88
    %v236 = vunpack.c.h.b16 %v88
    %v237 = vunpack.c.l.b16 %v89
    %v238 = vunpack.c.h.b16 %v89
    %v239 = vunpack.c.l.b16 %v90
    %v240 = vunpack.c.h.b16 %v90
    %v241 = vunpack.c.l.b16 %v91
    %v242 = vunpack.c.h.b16 %v91
    %v243 = vunpack.c.l.b16 %v92
    %v244 = vunpack.c.h.b16 %v92
    %v245 = vunpack.c.l.b16 %v93
    %v246 = vunpack.c.h.b16 %v93
    %v247 = vunpack.c.l.b16 %v94
    %v248 = vunpack.c.h.b16 %v94
    %v249 = vunpack.c.l.b16 %v95
    %v250 = vunpack.c.h.b16 %v95
    %v251 = vunpack.c.l.b16 %v96
    %v252 = vunpack.c.h.b16 %v96
    %v253 = vunpack.c.l.b16 %v97
    %v254 = vunpack.c.h.b16 %v97
    %v255 = vunpack.c.l.b16 %v98
    %v256 = vunpack.c.h.b16 %v98
    %v257 = vunpack.c.l.b16 %v99
    %v258 = vunpack.c.h.b16 %v99
    %v259 = vunpack.c.l.b16 %v100
    %v260 = vunpack.c.h.b16 %v100
    %v261 = vunpack.c.l.b16 %v101
    %v262 = vunpack.c.h.b16 %v101
    %v263 = vunpack.c.l.b16 %v102
    %v264 = vunpack.c.h.b16 %v102
    %v265 = vunpack.c.l.b16 %v103
    %v266 = vunpack.c.h.b16 %v103
    %v267 = vunpack.c.l.b16 %v104
    %v268 = vunpack.c.h.b16 %v104
    %v269 = vunpack.c.l.b16 %v105
    %v270 = vunpack.c.h.b16 %v105
    %v271 = vunpack.c.l.b16 %v106
    %v272 = vunpack.c.h.b16 %v106
    %v273 = vunpack.c.l.b16 %v107
    %v274 = vunpack.c.h.b16 %v107
    %v275 = vunpack.c.l.b16 %v108
    %v276 = vunpack.c.h.b16 %v108
    %v277 = vunpack.c.l.b16 %v109
    %v278 = vunpack.c.h.b16 %v109
    %v279 = vunpack.c.l.b16 %v110
    %v280 = vunpack.c.h.b16 %v110
    %v281 = vunpack.c.l.b16 %v111
    %v282 = vunpack.c.h.b16 %v111
    %v283 = vunpack.c.l.b16 %v112
    %v284 = vunpack.c.h.b16 %v112
    %v285 = vunpack.c.l.b16 %v113
    %v286 = vunpack.c.h.b16 %v113
    %v287 = vunpack.c.l.b16 %v114
    %v288 = vunpack.c.h.b16 %v114
    %v289 = vunpack.c.l.b16 %v115
    %v290 = vunpack.c.h.b16 %v115
    %v291 = vunpack.c.l.b16 %v116
    %v292 = vunpack.c.h.b16 %v116
    %v293 = vunpack.c.l.b16 %v117
    %v294 = vunpack.c.h.b16 %v117
    %v295 = vunpack.c.l.b16 %v118
    %v296 = vunpack.c.h.b16 %v118
    %v297 = vunpack.c.l.b16 %v119
    %v298 = vunpack.c.h.b16 %v119
    %v299 = vunpack.c.l.b16 %v120
    %v300 = vunpack.c.h.b16 %v120
    %v301 = vunpack.c.l.b16 %v121
    %v302 = vunpack.c.h.b16 %v121
    %v303 = vunpack.c.l.b16 %v122
    %v304 = vunpack.c.h.b16 %v122
    %v305 = vunpack.c.l.b16 %v123
    %v306 = vunpack.c.h.b16 %v123
    %v307 = vunpack.c.l.b16 %v124
    %v308 = vunpack.c.h.b16 %v124
    %v309 = vunpack.c.l.b16 %v125
    %v310 = vunpack.c.h.b16 %v125
    %v311 = vunpack.c.l.b16 %v126
    %v312 = vunpack.c.h.b16 %v126
    %v313 = vunpack.c.l.b16 %v127
    %v314 = vunpack.c.h.b16 %v127
    %v315 = vunpack.c.l.b16 %v128
    %v316 = vunpack.c.h.b16 %v128
    %v317 = vunpack.c.l.b16 %v129
    %v318 = vunpack.c.h.b16 %v129
    %v319 = vunpack.c.l.b16 %v130
    %v320 = vunpack.c.h.b16 %v130
    %v321 = vunpack.c.l.b16 %v131
    %v322 = vunpack.c.h.b16 %v131
    %v323 = vunpack.c.l.b16 %v132
    %v324 = vunpack.c.h.b16 %v132
    %v325 = vunpack.c.l.b16 %v133
    %v326 = vunpack.c.h.b16 %v133
    %v327 = vunpack.c.l.b16 %v134
    %v328 = vunpack.c.h.b16 %v134
    %v329 = vunpack.c.l.b16 %v135
    %v330 = vunpack.c.h.b16 %v135
    %v331 = vunpack.c.l.b16 %v136
    %v332 = vunpack.c.h.b16 %v136
    %v333 = vunpack.c.l.b16 %v137
    %v334 = vunpack.c.h.b16 %v137
    %v335 = vunpack.c.l.b16 %v138
    %v336 = vunpack.c.h.b16 %v138
    %v337 = vunpack.c.l.b16 %v139
    %v338 = vunpack.c.h.b16 %v139
    %v339 = vpack.c.b16 %v215, %v211
    %v340 = vpack.c.b16 %v216, %v212
    %v341 = vpack.c.b16 %v217, %v213
    %v342 = vpack.c.b16 %v218, %v214
    %v343 = vpack.c.b16 %v223, %v219
    %v344 = vpack.c.b16 %v224, %v220
    %v345 = vpack.c.b16 %v225, %v221
    %v346 = vpack.c.b16 %v226, %v222
    %v347 = vpack.c.b16 %v231, %v227
    %v348 = vpack.c.b16 %v232, %v228
    %v349 = vpack.c.b16 %v233, %v229
    %v350 = vpack.c.b16 %v234, %v230
    %v351 = vpack.c.b16 %v239, %v235
    %v352 = vpack.c.b16 %v240, %v236
    %v353 = vpack.c.b16 %v241, %v237
    %v354 = vpack.c.b16 %v242, %v238
    %v355 = vpack.c.b16 %v247, %v243
    %v356 = vpack.c.b16 %v248, %v244
    %v357 = vpack.c.b16 %v249, %v245
    %v358 = vpack.c.b16 %v250, %v246
    %v359 = vpack.c.b16 %v255, %v251
    %v360 = vpack.c.b16 %v256, %v252
    %v361 = vpack.c.b16 %v257, %v253
    %v362 = vpack.c.b16 %v258, %v254
    %v363 = vpack.c.b16 %v263, %v259
    %v364 = vpack.c.b16 %v264, %v260
    %v365 = vpack.c.b16 %v265, %v261
    %v366 = vpack.c.b16 %v266, %v262
    %v367 = vpack.c.b16 %v271, %v267
    %v368 = vpack.c.b16 %v272, %v268
    %v369 = vpack.c.b16 %v273, %v269
    %v370 = vpack.c.b16 %v274, %v270
    %v371 = vpack.c.b16 %v279, %v275
    %v372 = vpack.c.b16 %v280, %v276
    %v373 = vpack.c.b16 %v281, %v277
    %v374 = vpack.c.b16 %v282, %v278
    %v375 = vpack.c.b16 %v287, %v283
    %v376 = vpack.c.b16 %v288, %v284
    %v377 = vpack.c.b16 %v289, %v285
    %v378 = vpack.c.b16 %v290, %v286
    %v379 = vpack.c.b16 %v295, %v291
    %v380 = vpack.c.b16 %v296, %v292
    %v381 = vpack.c.b16 %v297, %v293
    %v382 = vpack.c.b16 %v298, %v294
    %v383 = vpack.c.b16 %v303, %v299
    %v384 = vpack.c.b16 %v304, %v300
    %v385 = vpack.c.b16 %v305, %v301
    %v386 = vpack.c.b16 %v306, %v302
    %v387 = vpack.c.b16 %v311, %v307
    %v388 = vpack.c.b16 %v312, %v308
    %v389 = vpack.c.b16 %v313, %v309
    %v390 = vpack.c.b16 %v314, %v310
    %v391 = vpack.c.b16 %v319, %v315
    %v392 = vpack.c.b16 %v320, %v316
    %v393 = vpack.c.b16 %v321, %v317
    %v394 = vpack.c.b16 %v322, %v318
    %v395 = vpack.c.b16 %v327, %v323
    %v396 = vpack.c.b16 %v328, %v324
    %v397 = vpack.c.b16 %v329, %v325
    %v398 = vpack.c.b16 %v330, %v326
    %v399 = vpack.c.b16 %v335, %v331
    %v400 = vpack.c.b16 %v336, %v332
    %v401 = vpack.c.b16 %v337, %v333
    %v402 = vpack.c.b16 %v338, %v334
    %467 = vmatpush.bf16.msra.mxu0 %v367
    %468 = vmatpush.bf16.msra.mxu0 %v363
    %469 = vmatpush.bf16.msra.mxu0 %v359
    %470 = vmatpush.bf16.msra.mxu0 %v355
    %471 = vmatpush.bf16.msra.mxu0 %v351
    %472 = vmatpush.bf16.msra.mxu0 %v347
    %473 = vmatpush.bf16.msra.mxu0 %v343
    %474 = vmatpush.bf16.msra.mxu0 %v339
    %475 = vmatmul.bf16.gmra.mxu0 %v143
    %v476 = vpop.f32.mrf.mxu0
    %v477 = vadd.f32 0.0, %v476
    %v478 = vpop.f32.mrf.mxu0
    %479 = vdwg.mxu0
    %480 = vmatpush.bf16.msra.mxu0 %v399
    %481 = vmatpush.bf16.msra.mxu0 %v395
    %482 = vmatpush.bf16.msra.mxu0 %v391
    %483 = vmatpush.bf16.msra.mxu0 %v387
    %484 = vmatpush.bf16.msra.mxu0 %v383
    %485 = vmatpush.bf16.msra.mxu0 %v379
    %486 = vmatpush.bf16.msra.mxu0 %v375
    %487 = vmatpush.bf16.msra.mxu0 %v371
    %488 = vmatmul.bf16.gmra.mxu0 %v144
    %v489 = vpop.f32.mrf.mxu0
    %v490 = vadd.f32 %v477, %v489
    %v491 = vpop.f32.mrf.mxu0
    %492 = vdwg.mxu0
    %493 = vmatpush.bf16.msra.mxu0 %v368
    %494 = vmatpush.bf16.msra.mxu0 %v364
    %495 = vmatpush.bf16.msra.mxu0 %v360
    %496 = vmatpush.bf16.msra.mxu0 %v356
    %497 = vmatpush.bf16.msra.mxu0 %v352
    %498 = vmatpush.bf16.msra.mxu0 %v348
    %499 = vmatpush.bf16.msra.mxu0 %v344
    %500 = vmatpush.bf16.msra.mxu0 %v340
    %501 = vmatmul.bf16.gmra.mxu0 %v143
    %v502 = vpop.f32.mrf.mxu0
    %v503 = vadd.f32 0.0, %v502
    %v504 = vpop.f32.mrf.mxu0
    %505 = vdwg.mxu0
    %506 = vmatpush.bf16.msra.mxu0 %v400
    %507 = vmatpush.bf16.msra.mxu0 %v396
    %508 = vmatpush.bf16.msra.mxu0 %v392
    %509 = vmatpush.bf16.msra.mxu0 %v388
    %510 = vmatpush.bf16.msra.mxu0 %v384
    %511 = vmatpush.bf16.msra.mxu0 %v380
    %512 = vmatpush.bf16.msra.mxu0 %v376
    %513 = vmatpush.bf16.msra.mxu0 %v372
    %514 = vmatmul.bf16.gmra.mxu0 %v144
    %v515 = vpop.f32.mrf.mxu0
    %v516 = vadd.f32 %v503, %v515
    %v517 = vpop.f32.mrf.mxu0
    %518 = vdwg.mxu0
    %519 = vmatpush.bf16.msra.mxu0 %v369
    %520 = vmatpush.bf16.msra.mxu0 %v365
    %521 = vmatpush.bf16.msra.mxu0 %v361
    %522 = vmatpush.bf16.msra.mxu0 %v357
    %523 = vmatpush.bf16.msra.mxu0 %v353
    %524 = vmatpush.bf16.msra.mxu0 %v349
    %525 = vmatpush.bf16.msra.mxu0 %v345
    %526 = vmatpush.bf16.msra.mxu0 %v341
    %527 = vmatmul.bf16.gmra.mxu0 %v143
    %v528 = vpop.f32.mrf.mxu0
    %v529 = vadd.f32 0.0, %v528
    %v530 = vpop.f32.mrf.mxu0
    %531 = vdwg.mxu0
    %532 = vmatpush.bf16.msra.mxu0 %v401
    %533 = vmatpush.bf16.msra.mxu0 %v397
    %534 = vmatpush.bf16.msra.mxu0 %v393
    %535 = vmatpush.bf16.msra.mxu0 %v389
    %536 = vmatpush.bf16.msra.mxu0 %v385
    %537 = vmatpush.bf16.msra.mxu0 %v381
    %538 = vmatpush.bf16.msra.mxu0 %v377
    %539 = vmatpush.bf16.msra.mxu0 %v373
    %540 = vmatmul.bf16.gmra.mxu0 %v144
    %v541 = vpop.f32.mrf.mxu0
    %v542 = vadd.f32 %v529, %v541
    %v543 = vpop.f32.mrf.mxu0
    %544 = vdwg.mxu0
    %545 = vmatpush.bf16.msra.mxu0 %v370
    %546 = vmatpush.bf16.msra.mxu0 %v366
    %547 = vmatpush.bf16.msra.mxu0 %v362
    %548 = vmatpush.bf16.msra.mxu0 %v358
    %549 = vmatpush.bf16.msra.mxu0 %v354
    %550 = vmatpush.bf16.msra.mxu0 %v350
    %551 = vmatpush.bf16.msra.mxu0 %v346
    %552 = vmatpush.bf16.msra.mxu0 %v342
    %553 = vmatmul.bf16.gmra.mxu0 %v143
    %v554 = vpop.f32.mrf.mxu0
    %v555 = vadd.f32 0.0, %v554
    %v556 = vpop.f32.mrf.mxu0
    %557 = vdwg.mxu0
    %558 = vmatpush.bf16.msra.mxu0 %v402
    %559 = vmatpush.bf16.msra.mxu0 %v398
    %560 = vmatpush.bf16.msra.mxu0 %v394
    %561 = vmatpush.bf16.msra.mxu0 %v390
    %562 = vmatpush.bf16.msra.mxu0 %v386
    %563 = vmatpush.bf16.msra.mxu0 %v382
    %564 = vmatpush.bf16.msra.mxu0 %v378
    %565 = vmatpush.bf16.msra.mxu0 %v374
    %566 = vmatmul.bf16.gmra.mxu0 %v144
    %v567 = vpop.f32.mrf.mxu0
    %v568 = vadd.f32 %v555, %v567
    %v569 = vpop.f32.mrf.mxu0
    %570 = vdwg.mxu0
    %s571 = scalar_lea.vmem %s6, 1
    %v572 = vld [vmem:[%s571] ss:$8 sm:$0xf]
    %s573 = scalar_lea.vmem %s6, 5
    %v574 = vld [vmem:[%s573] ss:$8 sm:$0xf]
    %v575 = vrot.slane %v490, 4
    %v576 = vadd.f32 %v490, %v575
    %v577 = vrot.slane %v576, 2
    %v578 = vadd.f32 %v576, %v577
    %v579 = vrot.slane %v578, 1
    %v580 = vadd.f32 %v578, %v579
    %v581 = vrot.slane %v516, 4
    %v582 = vadd.f32 %v516, %v581
    %v583 = vrot.slane %v582, 2
    %v584 = vadd.f32 %v582, %v583
    %v585 = vrot.slane %v584, 1
    %v586 = vadd.f32 %v584, %v585
    %v587 = vrot.slane %v542, 4
    %v588 = vadd.f32 %v542, %v587
    %v589 = vrot.slane %v588, 2
    %v590 = vadd.f32 %v588, %v589
    %v591 = vrot.slane %v590, 1
    %v592 = vadd.f32 %v590, %v591
    %v593 = vrot.slane %v568, 4
    %v594 = vadd.f32 %v568, %v593
    %v595 = vrot.slane %v594, 2
    %v596 = vadd.f32 %v594, %v595
    %v597 = vrot.slane %v596, 1
    %v598 = vadd.f32 %v596, %v597
    %v599 = vmul.f32 %v580, 0.125
    %v600 = vmul.f32 %v586, 0.125
    %v601 = vmul.f32 %v592, 0.125
    %v602 = vmul.f32 %v598, 0.125
    %v603 = vsub.f32 %v490, %v599
    %v604 = vsub.f32 %v516, %v600
    %v605 = vsub.f32 %v542, %v601
    %v606 = vsub.f32 %v568, %v602
    %v607 = vmul.f32 %v603, %v603
    %v608 = vmul.f32 %v604, %v604
    %v609 = vmul.f32 %v605, %v605
    %v610 = vmul.f32 %v606, %v606
    %v611 = vrot.slane %v607, 4
    %v612 = vadd.f32 %v607, %v611
    %v613 = vrot.slane %v612, 2
    %v614 = vadd.f32 %v612, %v613
    %v615 = vrot.slane %v614, 1
    %v616 = vadd.f32 %v614, %v615
    %v617 = vrot.slane %v608, 4
    %v618 = vadd.f32 %v608, %v617
    %v619 = vrot.slane %v618, 2
    %v620 = vadd.f32 %v618, %v619
    %v621 = vrot.slane %v620, 1
    %v622 = vadd.f32 %v620, %v621
    %v623 = vrot.slane %v609, 4
    %v624 = vadd.f32 %v609, %v623
    %v625 = vrot.slane %v624, 2
    %v626 = vadd.f32 %v624, %v625
    %v627 = vrot.slane %v626, 1
    %v628 = vadd.f32 %v626, %v627
    %v629 = vrot.slane %v610, 4
    %v630 = vadd.f32 %v610, %v629
    %v631 = vrot.slane %v630, 2
    %v632 = vadd.f32 %v630, %v631
    %v633 = vrot.slane %v632, 1
    %v634 = vadd.f32 %v632, %v633
    %v635 = vmul.f32 %v616, 0.125
    %v636 = vmul.f32 %v622, 0.125
    %v637 = vmul.f32 %v628, 0.125
    %v638 = vmul.f32 %v634, 0.125
    %v639 = vadd.f32 %v635, 1e-05
    %v640 = vadd.f32 %v636, 1e-05
    %v641 = vadd.f32 %v637, 1e-05
    %v642 = vadd.f32 %v638, 1e-05
    %v643 = vrsqrt.pop %v639
    %v644 = vmul.f32 %v643, %v639
    %v645 = vmul.f32 %v644, %v643
    %v646 = vmul.f32 0.5, %v645
    %v647 = vsub.f32 1.5, %v646
    %v648 = vmul.f32 %v643, %v647
    %vm649 = vweird.f32 %v639
    %vm650 = vweird.f32 %v643
    %vm651 = vmor %vm649, %vm650
    %v652 = vsel %vm651, %v643, %v648
    %v653 = vrsqrt.pop %v640
    %v654 = vmul.f32 %v653, %v640
    %v655 = vmul.f32 %v654, %v653
    %v656 = vmul.f32 0.5, %v655
    %v657 = vsub.f32 1.5, %v656
    %v658 = vmul.f32 %v653, %v657
    %vm659 = vweird.f32 %v640
    %vm660 = vweird.f32 %v653
    %vm661 = vmor %vm659, %vm660
    %v662 = vsel %vm661, %v653, %v658
    %v663 = vrsqrt.pop %v641
    %v664 = vmul.f32 %v663, %v641
    %v665 = vmul.f32 %v664, %v663
    %v666 = vmul.f32 0.5, %v665
    %v667 = vsub.f32 1.5, %v666
    %v668 = vmul.f32 %v663, %v667
    %vm669 = vweird.f32 %v641
    %vm670 = vweird.f32 %v663
    %vm671 = vmor %vm669, %vm670
    %v672 = vsel %vm671, %v663, %v668
    %v673 = vrsqrt.pop %v642
    %v674 = vmul.f32 %v673, %v642
    %v675 = vmul.f32 %v674, %v673
    %v676 = vmul.f32 0.5, %v675
    %v677 = vsub.f32 1.5, %v676
    %v678 = vmul.f32 %v673, %v677
    %vm679 = vweird.f32 %v642
    %vm680 = vweird.f32 %v673
    %vm681 = vmor %vm679, %vm680
    %v682 = vsel %vm681, %v673, %v678
    %v687 = vrot.slane %v662, 7
    %v688 = vrot.slane %v672, 6
    %v689 = vrot.slane %v682, 5
    %vm690 = vcmask 1040384
    %v691 = vsel %vm690, %v652, %v687
    %vm692 = vcmask 1042434
    %v693 = vsel %vm692, %v688, %v689
    %vm694 = vcmask 1041408
    %v695 = vsel %vm694, %v691, %v693
    %v697 = vmul.f32 %v572, %v695
    %v699 = vperm.slane %v697, 0
    %v700 = vperm.slane %v697, 1
    %v701 = vperm.slane %v697, 2
    %v702 = vperm.slane %v697, 3
    %v707 = vmul.f32 %v603, %v699
    %v708 = vmul.f32 %v604, %v700
    %v709 = vmul.f32 %v605, %v701
    %v710 = vmul.f32 %v606, %v702
    %v712 = vperm.slane %v574, 0
    %v713 = vperm.slane %v574, 1
    %v714 = vperm.slane %v574, 2
    %v715 = vperm.slane %v574, 3
    %v720 = vadd.f32 %v707, %v712
    %v721 = vadd.f32 %v708, %v713
    %v722 = vadd.f32 %v709, %v714
    %v723 = vadd.f32 %v710, %v715
    %v724 = vmax.f32 %v720, 0.0
    %v725 = vmax.f32 %v721, 0.0
    %v726 = vmax.f32 %v722, 0.0
    %v727 = vmax.f32 %v723, 0.0
    %v728 = vld [vmem:[#allocation5] sm:$0xff]
    %v729 = vld [vmem:[#allocation5 + $0x8] sm:$0xff]
    %v730 = vld [vmem:[#allocation5 + $0x10] sm:$0xff]
    %v731 = vld [vmem:[#allocation5 + $0x18] sm:$0xff]
    %v732 = vld [vmem:[#allocation5 + $0x20] sm:$0xff]
    %v733 = vld [vmem:[#allocation5 + $0x28] sm:$0xff]
    %v734 = vld [vmem:[#allocation5 + $0x30] sm:$0xff]
    %v735 = vld [vmem:[#allocation5 + $0x38] sm:$0xff]
    %v736 = vld [vmem:[#allocation5 + $0x40] sm:$0xff]
    %v737 = vld [vmem:[#allocation5 + $0x48] sm:$0xff]
    %v738 = vld [vmem:[#allocation5 + $0x50] sm:$0xff]
    %v739 = vld [vmem:[#allocation5 + $0x58] sm:$0xff]
    %v740 = vld [vmem:[#allocation5 + $0x60] sm:$0xff]
    %v741 = vld [vmem:[#allocation5 + $0x68] sm:$0xff]
    %v742 = vld [vmem:[#allocation5 + $0x70] sm:$0xff]
    %v743 = vld [vmem:[#allocation5 + $0x78] sm:$0xff]
    %v744 = vld [vmem:[#allocation5 + $0x80] sm:$0xff]
    %v745 = vld [vmem:[#allocation5 + $0x88] sm:$0xff]
    %v746 = vld [vmem:[#allocation5 + $0x90] sm:$0xff]
    %v747 = vld [vmem:[#allocation5 + $0x98] sm:$0xff]
    %v748 = vld [vmem:[#allocation5 + $0xa0] sm:$0xff]
    %v749 = vld [vmem:[#allocation5 + $0xa8] sm:$0xff]
    %v750 = vld [vmem:[#allocation5 + $0xb0] sm:$0xff]
    %v751 = vld [vmem:[#allocation5 + $0xb8] sm:$0xff]
    %v752 = vld [vmem:[#allocation5 + $0xc0] sm:$0xff]
    %v753 = vld [vmem:[#allocation5 + $0xc8] sm:$0xff]
    %v754 = vld [vmem:[#allocation5 + $0xd0] sm:$0xff]
    %v755 = vld [vmem:[#allocation5 + $0xd8] sm:$0xff]
    %v756 = vld [vmem:[#allocation5 + $0xe0] sm:$0xff]
    %v757 = vld [vmem:[#allocation5 + $0xe8] sm:$0xff]
    %v758 = vld [vmem:[#allocation5 + $0xf0] sm:$0xff]
    %v759 = vld [vmem:[#allocation5 + $0xf8] sm:$0xff]
    %v760 = vld [vmem:[#allocation5 + $0x100] sm:$0xff]
    %v761 = vld [vmem:[#allocation5 + $0x108] sm:$0xff]
    %v762 = vld [vmem:[#allocation5 + $0x110] sm:$0xff]
    %v763 = vld [vmem:[#allocation5 + $0x118] sm:$0xff]
    %v764 = vld [vmem:[#allocation5 + $0x120] sm:$0xff]
    %v765 = vld [vmem:[#allocation5 + $0x128] sm:$0xff]
    %v766 = vld [vmem:[#allocation5 + $0x130] sm:$0xff]
    %v767 = vld [vmem:[#allocation5 + $0x138] sm:$0xff]
    %v768 = vld [vmem:[#allocation5 + $0x140] sm:$0xff]
    %v769 = vld [vmem:[#allocation5 + $0x148] sm:$0xff]
    %v770 = vld [vmem:[#allocation5 + $0x150] sm:$0xff]
    %v771 = vld [vmem:[#allocation5 + $0x158] sm:$0xff]
    %v772 = vld [vmem:[#allocation5 + $0x160] sm:$0xff]
    %v773 = vld [vmem:[#allocation5 + $0x168] sm:$0xff]
    %v774 = vld [vmem:[#allocation5 + $0x170] sm:$0xff]
    %v775 = vld [vmem:[#allocation5 + $0x178] sm:$0xff]
    %v776 = vld [vmem:[#allocation5 + $0x180] sm:$0xff]
    %v777 = vld [vmem:[#allocation5 + $0x188] sm:$0xff]
    %v778 = vld [vmem:[#allocation5 + $0x190] sm:$0xff]
    %v779 = vld [vmem:[#allocation5 + $0x198] sm:$0xff]
    %v780 = vld [vmem:[#allocation5 + $0x1a0] sm:$0xff]
    %v781 = vld [vmem:[#allocation5 + $0x1a8] sm:$0xff]
    %v782 = vld [vmem:[#allocation5 + $0x1b0] sm:$0xff]
    %v783 = vld [vmem:[#allocation5 + $0x1b8] sm:$0xff]
    %v784 = vld [vmem:[#allocation5 + $0x1c0] sm:$0xff]
    %v785 = vld [vmem:[#allocation5 + $0x1c8] sm:$0xff]
    %v786 = vld [vmem:[#allocation5 + $0x1d0] sm:$0xff]
    %v787 = vld [vmem:[#allocation5 + $0x1d8] sm:$0xff]
    %v788 = vld [vmem:[#allocation5 + $0x1e0] sm:$0xff]
    %v789 = vld [vmem:[#allocation5 + $0x1e8] sm:$0xff]
    %v790 = vld [vmem:[#allocation5 + $0x1f0] sm:$0xff]
    %v791 = vld [vmem:[#allocation5 + $0x1f8] sm:$0xff]
    %v792 = vpack.c.bf16 %v724, %v724
    %v793 = vpack.c.bf16 %v725, %v725
    %v794 = vpack.c.bf16 %v726, %v726
    %v795 = vpack.c.bf16 %v727, %v727
    %v860 = vunpack.c.l.b16 %v728
    %v861 = vunpack.c.h.b16 %v728
    %v862 = vunpack.c.l.b16 %v729
    %v863 = vunpack.c.h.b16 %v729
    %v864 = vunpack.c.l.b16 %v730
    %v865 = vunpack.c.h.b16 %v730
    %v866 = vunpack.c.l.b16 %v731
    %v867 = vunpack.c.h.b16 %v731
    %v868 = vunpack.c.l.b16 %v732
    %v869 = vunpack.c.h.b16 %v732
    %v870 = vunpack.c.l.b16 %v733
    %v871 = vunpack.c.h.b16 %v733
    %v872 = vunpack.c.l.b16 %v734
    %v873 = vunpack.c.h.b16 %v734
    %v874 = vunpack.c.l.b16 %v735
    %v875 = vunpack.c.h.b16 %v735
    %v876 = vunpack.c.l.b16 %v736
    %v877 = vunpack.c.h.b16 %v736
    %v878 = vunpack.c.l.b16 %v737
    %v879 = vunpack.c.h.b16 %v737
    %v880 = vunpack.c.l.b16 %v738
    %v881 = vunpack.c.h.b16 %v738
    %v882 = vunpack.c.l.b16 %v739
    %v883 = vunpack.c.h.b16 %v739
    %v884 = vunpack.c.l.b16 %v740
    %v885 = vunpack.c.h.b16 %v740
    %v886 = vunpack.c.l.b16 %v741
    %v887 = vunpack.c.h.b16 %v741
    %v888 = vunpack.c.l.b16 %v742
    %v889 = vunpack.c.h.b16 %v742
    %v890 = vunpack.c.l.b16 %v743
    %v891 = vunpack.c.h.b16 %v743
    %v892 = vunpack.c.l.b16 %v744
    %v893 = vunpack.c.h.b16 %v744
    %v894 = vunpack.c.l.b16 %v745
    %v895 = vunpack.c.h.b16 %v745
    %v896 = vunpack.c.l.b16 %v746
    %v897 = vunpack.c.h.b16 %v746
    %v898 = vunpack.c.l.b16 %v747
    %v899 = vunpack.c.h.b16 %v747
    %v900 = vunpack.c.l.b16 %v748
    %v901 = vunpack.c.h.b16 %v748
    %v902 = vunpack.c.l.b16 %v749
    %v903 = vunpack.c.h.b16 %v749
    %v904 = vunpack.c.l.b16 %v750
    %v905 = vunpack.c.h.b16 %v750
    %v906 = vunpack.c.l.b16 %v751
    %v907 = vunpack.c.h.b16 %v751
    %v908 = vunpack.c.l.b16 %v752
    %v909 = vunpack.c.h.b16 %v752
    %v910 = vunpack.c.l.b16 %v753
    %v911 = vunpack.c.h.b16 %v753
    %v912 = vunpack.c.l.b16 %v754
    %v913 = vunpack.c.h.b16 %v754
    %v914 = vunpack.c.l.b16 %v755
    %v915 = vunpack.c.h.b16 %v755
    %v916 = vunpack.c.l.b16 %v756
    %v917 = vunpack.c.h.b16 %v756
    %v918 = vunpack.c.l.b16 %v757
    %v919 = vunpack.c.h.b16 %v757
    %v920 = vunpack.c.l.b16 %v758
    %v921 = vunpack.c.h.b16 %v758
    %v922 = vunpack.c.l.b16 %v759
    %v923 = vunpack.c.h.b16 %v759
    %v924 = vunpack.c.l.b16 %v760
    %v925 = vunpack.c.h.b16 %v760
    %v926 = vunpack.c.l.b16 %v761
    %v927 = vunpack.c.h.b16 %v761
    %v928 = vunpack.c.l.b16 %v762
    %v929 = vunpack.c.h.b16 %v762
    %v930 = vunpack.c.l.b16 %v763
    %v931 = vunpack.c.h.b16 %v763
    %v932 = vunpack.c.l.b16 %v764
    %v933 = vunpack.c.h.b16 %v764
    %v934 = vunpack.c.l.b16 %v765
    %v935 = vunpack.c.h.b16 %v765
    %v936 = vunpack.c.l.b16 %v766
    %v937 = vunpack.c.h.b16 %v766
    %v938 = vunpack.c.l.b16 %v767
    %v939 = vunpack.c.h.b16 %v767
    %v940 = vunpack.c.l.b16 %v768
    %v941 = vunpack.c.h.b16 %v768
    %v942 = vunpack.c.l.b16 %v769
    %v943 = vunpack.c.h.b16 %v769
    %v944 = vunpack.c.l.b16 %v770
    %v945 = vunpack.c.h.b16 %v770
    %v946 = vunpack.c.l.b16 %v771
    %v947 = vunpack.c.h.b16 %v771
    %v948 = vunpack.c.l.b16 %v772
    %v949 = vunpack.c.h.b16 %v772
    %v950 = vunpack.c.l.b16 %v773
    %v951 = vunpack.c.h.b16 %v773
    %v952 = vunpack.c.l.b16 %v774
    %v953 = vunpack.c.h.b16 %v774
    %v954 = vunpack.c.l.b16 %v775
    %v955 = vunpack.c.h.b16 %v775
    %v956 = vunpack.c.l.b16 %v776
    %v957 = vunpack.c.h.b16 %v776
    %v958 = vunpack.c.l.b16 %v777
    %v959 = vunpack.c.h.b16 %v777
    %v960 = vunpack.c.l.b16 %v778
    %v961 = vunpack.c.h.b16 %v778
    %v962 = vunpack.c.l.b16 %v779
    %v963 = vunpack.c.h.b16 %v779
    %v964 = vunpack.c.l.b16 %v780
    %v965 = vunpack.c.h.b16 %v780
    %v966 = vunpack.c.l.b16 %v781
    %v967 = vunpack.c.h.b16 %v781
    %v968 = vunpack.c.l.b16 %v782
    %v969 = vunpack.c.h.b16 %v782
    %v970 = vunpack.c.l.b16 %v783
    %v971 = vunpack.c.h.b16 %v783
    %v972 = vunpack.c.l.b16 %v784
    %v973 = vunpack.c.h.b16 %v784
    %v974 = vunpack.c.l.b16 %v785
    %v975 = vunpack.c.h.b16 %v785
    %v976 = vunpack.c.l.b16 %v786
    %v977 = vunpack.c.h.b16 %v786
    %v978 = vunpack.c.l.b16 %v787
    %v979 = vunpack.c.h.b16 %v787
    %v980 = vunpack.c.l.b16 %v788
    %v981 = vunpack.c.h.b16 %v788
    %v982 = vunpack.c.l.b16 %v789
    %v983 = vunpack.c.h.b16 %v789
    %v984 = vunpack.c.l.b16 %v790
    %v985 = vunpack.c.h.b16 %v790
    %v986 = vunpack.c.l.b16 %v791
    %v987 = vunpack.c.h.b16 %v791
    %v988 = vpack.c.b16 %v862, %v860
    %v989 = vpack.c.b16 %v863, %v861
    %v990 = vpack.c.b16 %v866, %v864
    %v991 = vpack.c.b16 %v867, %v865
    %v992 = vpack.c.b16 %v870, %v868
    %v993 = vpack.c.b16 %v871, %v869
    %v994 = vpack.c.b16 %v874, %v872
    %v995 = vpack.c.b16 %v875, %v873
    %v996 = vpack.c.b16 %v878, %v876
    %v997 = vpack.c.b16 %v879, %v877
    %v998 = vpack.c.b16 %v882, %v880
    %v999 = vpack.c.b16 %v883, %v881
    %v1000 = vpack.c.b16 %v886, %v884
    %v1001 = vpack.c.b16 %v887, %v885
    %v1002 = vpack.c.b16 %v890, %v888
    %v1003 = vpack.c.b16 %v891, %v889
    %v1004 = vpack.c.b16 %v894, %v892
    %v1005 = vpack.c.b16 %v895, %v893
    %v1006 = vpack.c.b16 %v898, %v896
    %v1007 = vpack.c.b16 %v899, %v897
    %v1008 = vpack.c.b16 %v902, %v900
    %v1009 = vpack.c.b16 %v903, %v901
    %v1010 = vpack.c.b16 %v906, %v904
    %v1011 = vpack.c.b16 %v907, %v905
    %v1012 = vpack.c.b16 %v910, %v908
    %v1013 = vpack.c.b16 %v911, %v909
    %v1014 = vpack.c.b16 %v914, %v912
    %v1015 = vpack.c.b16 %v915, %v913
    %v1016 = vpack.c.b16 %v918, %v916
    %v1017 = vpack.c.b16 %v919, %v917
    %v1018 = vpack.c.b16 %v922, %v920
    %v1019 = vpack.c.b16 %v923, %v921
    %v1020 = vpack.c.b16 %v926, %v924
    %v1021 = vpack.c.b16 %v927, %v925
    %v1022 = vpack.c.b16 %v930, %v928
    %v1023 = vpack.c.b16 %v931, %v929
    %v1024 = vpack.c.b16 %v934, %v932
    %v1025 = vpack.c.b16 %v935, %v933
    %v1026 = vpack.c.b16 %v938, %v936
    %v1027 = vpack.c.b16 %v939, %v937
    %v1028 = vpack.c.b16 %v942, %v940
    %v1029 = vpack.c.b16 %v943, %v941
    %v1030 = vpack.c.b16 %v946, %v944
    %v1031 = vpack.c.b16 %v947, %v945
    %v1032 = vpack.c.b16 %v950, %v948
    %v1033 = vpack.c.b16 %v951, %v949
    %v1034 = vpack.c.b16 %v954, %v952
    %v1035 = vpack.c.b16 %v955, %v953
    %v1036 = vpack.c.b16 %v958, %v956
    %v1037 = vpack.c.b16 %v959, %v957
    %v1038 = vpack.c.b16 %v962, %v960
    %v1039 = vpack.c.b16 %v963, %v961
    %v1040 = vpack.c.b16 %v966, %v964
    %v1041 = vpack.c.b16 %v967, %v965
    %v1042 = vpack.c.b16 %v970, %v968
    %v1043 = vpack.c.b16 %v971, %v969
    %v1044 = vpack.c.b16 %v974, %v972
    %v1045 = vpack.c.b16 %v975, %v973
    %v1046 = vpack.c.b16 %v978, %v976
    %v1047 = vpack.c.b16 %v979, %v977
    %v1048 = vpack.c.b16 %v982, %v980
    %v1049 = vpack.c.b16 %v983, %v981
    %v1050 = vpack.c.b16 %v986, %v984
    %v1051 = vpack.c.b16 %v987, %v985
    %1116 = vmatpush.bf16.msra.mxu0 %v1002
    %1117 = vmatpush.bf16.msra.mxu0 %v1000
    %1118 = vmatpush.bf16.msra.mxu0 %v998
    %1119 = vmatpush.bf16.msra.mxu0 %v996
    %1120 = vmatpush.bf16.msra.mxu0 %v994
    %1121 = vmatpush.bf16.msra.mxu0 %v992
    %1122 = vmatpush.bf16.msra.mxu0 %v990
    %1123 = vmatpush.bf16.msra.mxu0 %v988
    %1124 = vmatmul.bf16.gmra.mxu0 %v792
    %v1125 = vpop.f32.mrf.mxu0
    %v1126 = vadd.f32 0.0, %v1125
    %v1127 = vpop.f32.mrf.mxu0
    %1128 = vdwg.mxu0
    %1129 = vmatpush.bf16.msra.mxu0 %v1018
    %1130 = vmatpush.bf16.msra.mxu0 %v1016
    %1131 = vmatpush.bf16.msra.mxu0 %v1014
    %1132 = vmatpush.bf16.msra.mxu0 %v1012
    %1133 = vmatpush.bf16.msra.mxu0 %v1010
    %1134 = vmatpush.bf16.msra.mxu0 %v1008
    %1135 = vmatpush.bf16.msra.mxu0 %v1006
    %1136 = vmatpush.bf16.msra.mxu0 %v1004
    %1137 = vmatmul.bf16.gmra.mxu0 %v793
    %v1138 = vpop.f32.mrf.mxu0
    %v1139 = vadd.f32 %v1126, %v1138
    %v1140 = vpop.f32.mrf.mxu0
    %1141 = vdwg.mxu0
    %1142 = vmatpush.bf16.msra.mxu0 %v1034
    %1143 = vmatpush.bf16.msra.mxu0 %v1032
    %1144 = vmatpush.bf16.msra.mxu0 %v1030
    %1145 = vmatpush.bf16.msra.mxu0 %v1028
    %1146 = vmatpush.bf16.msra.mxu0 %v1026
    %1147 = vmatpush.bf16.msra.mxu0 %v1024
    %1148 = vmatpush.bf16.msra.mxu0 %v1022
    %1149 = vmatpush.bf16.msra.mxu0 %v1020
    %1150 = vmatmul.bf16.gmra.mxu0 %v794
    %v1151 = vpop.f32.mrf.mxu0
    %v1152 = vadd.f32 %v1139, %v1151
    %v1153 = vpop.f32.mrf.mxu0
    %1154 = vdwg.mxu0
    %1155 = vmatpush.bf16.msra.mxu0 %v1050
    %1156 = vmatpush.bf16.msra.mxu0 %v1048
    %1157 = vmatpush.bf16.msra.mxu0 %v1046
    %1158 = vmatpush.bf16.msra.mxu0 %v1044
    %1159 = vmatpush.bf16.msra.mxu0 %v1042
    %1160 = vmatpush.bf16.msra.mxu0 %v1040
    %1161 = vmatpush.bf16.msra.mxu0 %v1038
    %1162 = vmatpush.bf16.msra.mxu0 %v1036
    %1163 = vmatmul.bf16.gmra.mxu0 %v795
    %v1164 = vpop.f32.mrf.mxu0
    %v1165 = vadd.f32 %v1152, %v1164
    %v1166 = vpop.f32.mrf.mxu0
    %1167 = vdwg.mxu0
    %1168 = vmatpush.bf16.msra.mxu0 %v1003
    %1169 = vmatpush.bf16.msra.mxu0 %v1001
    %1170 = vmatpush.bf16.msra.mxu0 %v999
    %1171 = vmatpush.bf16.msra.mxu0 %v997
    %1172 = vmatpush.bf16.msra.mxu0 %v995
    %1173 = vmatpush.bf16.msra.mxu0 %v993
    %1174 = vmatpush.bf16.msra.mxu0 %v991
    %1175 = vmatpush.bf16.msra.mxu0 %v989
    %1176 = vmatmul.bf16.gmra.mxu0 %v792
    %v1177 = vpop.f32.mrf.mxu0
    %v1178 = vadd.f32 0.0, %v1177
    %v1179 = vpop.f32.mrf.mxu0
    %1180 = vdwg.mxu0
    %1181 = vmatpush.bf16.msra.mxu0 %v1019
    %1182 = vmatpush.bf16.msra.mxu0 %v1017
    %1183 = vmatpush.bf16.msra.mxu0 %v1015
    %1184 = vmatpush.bf16.msra.mxu0 %v1013
    %1185 = vmatpush.bf16.msra.mxu0 %v1011
    %1186 = vmatpush.bf16.msra.mxu0 %v1009
    %1187 = vmatpush.bf16.msra.mxu0 %v1007
    %1188 = vmatpush.bf16.msra.mxu0 %v1005
    %1189 = vmatmul.bf16.gmra.mxu0 %v793
    %v1190 = vpop.f32.mrf.mxu0
    %v1191 = vadd.f32 %v1178, %v1190
    %v1192 = vpop.f32.mrf.mxu0
    %1193 = vdwg.mxu0
    %1194 = vmatpush.bf16.msra.mxu0 %v1035
    %1195 = vmatpush.bf16.msra.mxu0 %v1033
    %1196 = vmatpush.bf16.msra.mxu0 %v1031
    %1197 = vmatpush.bf16.msra.mxu0 %v1029
    %1198 = vmatpush.bf16.msra.mxu0 %v1027
    %1199 = vmatpush.bf16.msra.mxu0 %v1025
    %1200 = vmatpush.bf16.msra.mxu0 %v1023
    %1201 = vmatpush.bf16.msra.mxu0 %v1021
    %1202 = vmatmul.bf16.gmra.mxu0 %v794
    %v1203 = vpop.f32.mrf.mxu0
    %v1204 = vadd.f32 %v1191, %v1203
    %v1205 = vpop.f32.mrf.mxu0
    %1206 = vdwg.mxu0
    %1207 = vmatpush.bf16.msra.mxu0 %v1051
    %1208 = vmatpush.bf16.msra.mxu0 %v1049
    %1209 = vmatpush.bf16.msra.mxu0 %v1047
    %1210 = vmatpush.bf16.msra.mxu0 %v1045
    %1211 = vmatpush.bf16.msra.mxu0 %v1043
    %1212 = vmatpush.bf16.msra.mxu0 %v1041
    %1213 = vmatpush.bf16.msra.mxu0 %v1039
    %1214 = vmatpush.bf16.msra.mxu0 %v1037
    %1215 = vmatmul.bf16.gmra.mxu0 %v795
    %v1216 = vpop.f32.mrf.mxu0
    %v1217 = vadd.f32 %v1204, %v1216
    %v1218 = vpop.f32.mrf.mxu0
    %1219 = vdwg.mxu0
    %s1220 = scalar_lea.vmem %s6, 2
    %v1221 = vld [vmem:[%s1220] ss:$8 sm:$0x3]
    %s1222 = scalar_lea.vmem %s6, 6
    %v1223 = vld [vmem:[%s1222] ss:$8 sm:$0x3]
    %v1224 = vrot.slane %v1165, 4
    %v1225 = vadd.f32 %v1165, %v1224
    %v1226 = vrot.slane %v1225, 2
    %v1227 = vadd.f32 %v1225, %v1226
    %v1228 = vrot.slane %v1227, 1
    %v1229 = vadd.f32 %v1227, %v1228
    %v1230 = vrot.slane %v1217, 4
    %v1231 = vadd.f32 %v1217, %v1230
    %v1232 = vrot.slane %v1231, 2
    %v1233 = vadd.f32 %v1231, %v1232
    %v1234 = vrot.slane %v1233, 1
    %v1235 = vadd.f32 %v1233, %v1234
    %v1236 = vmul.f32 %v1229, 0.125
    %v1237 = vmul.f32 %v1235, 0.125
    %v1238 = vsub.f32 %v1165, %v1236
    %v1239 = vsub.f32 %v1217, %v1237
    %v1240 = vmul.f32 %v1238, %v1238
    %v1241 = vmul.f32 %v1239, %v1239
    %v1242 = vrot.slane %v1240, 4
    %v1243 = vadd.f32 %v1240, %v1242
    %v1244 = vrot.slane %v1243, 2
    %v1245 = vadd.f32 %v1243, %v1244
    %v1246 = vrot.slane %v1245, 1
    %v1247 = vadd.f32 %v1245, %v1246
    %v1248 = vrot.slane %v1241, 4
    %v1249 = vadd.f32 %v1241, %v1248
    %v1250 = vrot.slane %v1249, 2
    %v1251 = vadd.f32 %v1249, %v1250
    %v1252 = vrot.slane %v1251, 1
    %v1253 = vadd.f32 %v1251, %v1252
    %v1254 = vmul.f32 %v1247, 0.125
    %v1255 = vmul.f32 %v1253, 0.125
    %v1256 = vadd.f32 %v1254, 1e-05
    %v1257 = vadd.f32 %v1255, 1e-05
    %v1258 = vrsqrt.pop %v1256
    %v1259 = vmul.f32 %v1258, %v1256
    %v1260 = vmul.f32 %v1259, %v1258
    %v1261 = vmul.f32 0.5, %v1260
    %v1262 = vsub.f32 1.5, %v1261
    %v1263 = vmul.f32 %v1258, %v1262
    %vm1264 = vweird.f32 %v1256
    %vm1265 = vweird.f32 %v1258
    %vm1266 = vmor %vm1264, %vm1265
    %v1267 = vsel %vm1266, %v1258, %v1263
    %v1268 = vrsqrt.pop %v1257
    %v1269 = vmul.f32 %v1268, %v1257
    %v1270 = vmul.f32 %v1269, %v1268
    %v1271 = vmul.f32 0.5, %v1270
    %v1272 = vsub.f32 1.5, %v1271
    %v1273 = vmul.f32 %v1268, %v1272
    %vm1274 = vweird.f32 %v1257
    %vm1275 = vweird.f32 %v1268
    %vm1276 = vmor %vm1274, %vm1275
    %v1277 = vsel %vm1276, %v1268, %v1273
    %v1280 = vrot.slane %v1277, 7
    %v1281 = vsel %vm690, %v1267, %v1280
    %v1283 = vmul.f32 %v1221, %v1281
    %v1285 = vperm.slane %v1283, 0
    %v1286 = vperm.slane %v1283, 1
    %v1289 = vmul.f32 %v1238, %v1285
    %v1290 = vmul.f32 %v1239, %v1286
    %v1292 = vperm.slane %v1223, 0
    %v1293 = vperm.slane %v1223, 1
    %v1296 = vadd.f32 %v1289, %v1292
    %v1297 = vadd.f32 %v1290, %v1293
    %v1298 = vmax.f32 %v1296, 0.0
    %v1299 = vmax.f32 %v1297, 0.0
    %v1300 = vld [vmem:[#allocation7] sm:$0xf]
    %v1301 = vld [vmem:[#allocation7 + $0x4] sm:$0xf]
    %v1302 = vld [vmem:[#allocation7 + $0x8] sm:$0xf]
    %v1303 = vld [vmem:[#allocation7 + $0xc] sm:$0xf]
    %v1304 = vld [vmem:[#allocation7 + $0x10] sm:$0xf]
    %v1305 = vld [vmem:[#allocation7 + $0x14] sm:$0xf]
    %v1306 = vld [vmem:[#allocation7 + $0x18] sm:$0xf]
    %v1307 = vld [vmem:[#allocation7 + $0x1c] sm:$0xf]
    %v1308 = vld [vmem:[#allocation7 + $0x20] sm:$0xf]
    %v1309 = vld [vmem:[#allocation7 + $0x24] sm:$0xf]
    %v1310 = vld [vmem:[#allocation7 + $0x28] sm:$0xf]
    %v1311 = vld [vmem:[#allocation7 + $0x2c] sm:$0xf]
    %v1312 = vld [vmem:[#allocation7 + $0x30] sm:$0xf]
    %v1313 = vld [vmem:[#allocation7 + $0x34] sm:$0xf]
    %v1314 = vld [vmem:[#allocation7 + $0x38] sm:$0xf]
    %v1315 = vld [vmem:[#allocation7 + $0x3c] sm:$0xf]
    %v1316 = vld [vmem:[#allocation7 + $0x40] sm:$0xf]
    %v1317 = vld [vmem:[#allocation7 + $0x44] sm:$0xf]
    %v1318 = vld [vmem:[#allocation7 + $0x48] sm:$0xf]
    %v1319 = vld [vmem:[#allocation7 + $0x4c] sm:$0xf]
    %v1320 = vld [vmem:[#allocation7 + $0x50] sm:$0xf]
    %v1321 = vld [vmem:[#allocation7 + $0x54] sm:$0xf]
    %v1322 = vld [vmem:[#allocation7 + $0x58] sm:$0xf]
    %v1323 = vld [vmem:[#allocation7 + $0x5c] sm:$0xf]
    %v1324 = vld [vmem:[#allocation7 + $0x60] sm:$0xf]
    %v1325 = vld [vmem:[#allocation7 + $0x64] sm:$0xf]
    %v1326 = vld [vmem:[#allocation7 + $0x68] sm:$0xf]
    %v1327 = vld [vmem:[#allocation7 + $0x6c] sm:$0xf]
    %v1328 = vld [vmem:[#allocation7 + $0x70] sm:$0xf]
    %v1329 = vld [vmem:[#allocation7 + $0x74] sm:$0xf]
    %v1330 = vld [vmem:[#allocation7 + $0x78] sm:$0xf]
    %v1331 = vld [vmem:[#allocation7 + $0x7c] sm:$0xf]
    %v1332 = vpack.c.bf16 %v1298, %v1298
    %v1333 = vpack.c.bf16 %v1299, %v1299
    %v1366 = vunpack.c.l.b16 %v1300
    %v1367 = vunpack.c.l.b16 %v1301
    %v1368 = vunpack.c.l.b16 %v1302
    %v1369 = vunpack.c.l.b16 %v1303
    %v1370 = vunpack.c.l.b16 %v1304
    %v1371 = vunpack.c.l.b16 %v1305
    %v1372 = vunpack.c.l.b16 %v1306
    %v1373 = vunpack.c.l.b16 %v1307
    %v1374 = vunpack.c.l.b16 %v1308
    %v1375 = vunpack.c.l.b16 %v1309
    %v1376 = vunpack.c.l.b16 %v1310
    %v1377 = vunpack.c.l.b16 %v1311
    %v1378 = vunpack.c.l.b16 %v1312
    %v1379 = vunpack.c.l.b16 %v1313
    %v1380 = vunpack.c.l.b16 %v1314
    %v1381 = vunpack.c.l.b16 %v1315
    %v1382 = vunpack.c.l.b16 %v1316
    %v1383 = vunpack.c.l.b16 %v1317
    %v1384 = vunpack.c.l.b16 %v1318
    %v1385 = vunpack.c.l.b16 %v1319
    %v1386 = vunpack.c.l.b16 %v1320
    %v1387 = vunpack.c.l.b16 %v1321
    %v1388 = vunpack.c.l.b16 %v1322
    %v1389 = vunpack.c.l.b16 %v1323
    %v1390 = vunpack.c.l.b16 %v1324
    %v1391 = vunpack.c.l.b16 %v1325
    %v1392 = vunpack.c.l.b16 %v1326
    %v1393 = vunpack.c.l.b16 %v1327
    %v1394 = vunpack.c.l.b16 %v1328
    %v1395 = vunpack.c.l.b16 %v1329
    %v1396 = vunpack.c.l.b16 %v1330
    %v1397 = vunpack.c.l.b16 %v1331
    %v1398 = vpack.c.b16 %v1367, %v1366
    %v1399 = vpack.c.b16 %v1369, %v1368
    %v1400 = vpack.c.b16 %v1371, %v1370
    %v1401 = vpack.c.b16 %v1373, %v1372
    %v1402 = vpack.c.b16 %v1375, %v1374
    %v1403 = vpack.c.b16 %v1377, %v1376
    %v1404 = vpack.c.b16 %v1379, %v1378
    %v1405 = vpack.c.b16 %v1381, %v1380
    %v1406 = vpack.c.b16 %v1383, %v1382
    %v1407 = vpack.c.b16 %v1385, %v1384
    %v1408 = vpack.c.b16 %v1387, %v1386
    %v1409 = vpack.c.b16 %v1389, %v1388
    %v1410 = vpack.c.b16 %v1391, %v1390
    %v1411 = vpack.c.b16 %v1393, %v1392
    %v1412 = vpack.c.b16 %v1395, %v1394
    %v1413 = vpack.c.b16 %v1397, %v1396
    %1430 = vmatpush.bf16.msra.mxu0 %v1405
    %1431 = vmatpush.bf16.msra.mxu0 %v1404
    %1432 = vmatpush.bf16.msra.mxu0 %v1403
    %1433 = vmatpush.bf16.msra.mxu0 %v1402
    %1434 = vmatpush.bf16.msra.mxu0 %v1401
    %1435 = vmatpush.bf16.msra.mxu0 %v1400
    %1436 = vmatpush.bf16.msra.mxu0 %v1399
    %1437 = vmatpush.bf16.msra.mxu0 %v1398
    %1438 = vmatmul.bf16.gmra.mxu0 %v1332
    %v1439 = vpop.f32.mrf.mxu0
    %v1440 = vadd.f32 0.0, %v1439
    %v1441 = vpop.f32.mrf.mxu0
    %1442 = vdwg.mxu0
    %1443 = vmatpush.bf16.msra.mxu0 %v1413
    %1444 = vmatpush.bf16.msra.mxu0 %v1412
    %1445 = vmatpush.bf16.msra.mxu0 %v1411
    %1446 = vmatpush.bf16.msra.mxu0 %v1410
    %1447 = vmatpush.bf16.msra.mxu0 %v1409
    %1448 = vmatpush.bf16.msra.mxu0 %v1408
    %1449 = vmatpush.bf16.msra.mxu0 %v1407
    %1450 = vmatpush.bf16.msra.mxu0 %v1406
    %1451 = vmatmul.bf16.gmra.mxu0 %v1333
    %v1452 = vpop.f32.mrf.mxu0
    %v1453 = vadd.f32 %v1440, %v1452
    %v1454 = vpop.f32.mrf.mxu0
    %1455 = vdwg.mxu0
    %v1456 = vld [vmem:[%s6 + $0x3] ss:$0 sm:$0xff]
    %v1457 = vld [vmem:[%s6 + $0x7] ss:$0 sm:$0xff]
    %v1458 = vrot.slane %v1453, 4
    %v1459 = vadd.f32 %v1453, %v1458
    %v1460 = vrot.slane %v1459, 2
    %v1461 = vadd.f32 %v1459, %v1460
    %v1462 = vrot.slane %v1461, 1
    %v1463 = vadd.f32 %v1461, %v1462
    %v1464 = vmul.f32 %v1463, 0.125
    %v1465 = vsub.f32 %v1453, %v1464
    %v1466 = vmul.f32 %v1465, %v1465
    %v1467 = vrot.slane %v1466, 4
    %v1468 = vadd.f32 %v1466, %v1467
    %v1469 = vrot.slane %v1468, 2
    %v1470 = vadd.f32 %v1468, %v1469
    %v1471 = vrot.slane %v1470, 1
    %v1472 = vadd.f32 %v1470, %v1471
    %v1473 = vmul.f32 %v1472, 0.125
    %v1474 = vadd.f32 %v1473, 1e-05
    %v1475 = vrsqrt.pop %v1474
    %v1476 = vmul.f32 %v1475, %v1474
    %v1477 = vmul.f32 %v1476, %v1475
    %v1478 = vmul.f32 0.5, %v1477
    %v1479 = vsub.f32 1.5, %v1478
    %v1480 = vmul.f32 %v1475, %v1479
    %vm1481 = vweird.f32 %v1474
    %vm1482 = vweird.f32 %v1475
    %vm1483 = vmor %vm1481, %vm1482
    %v1484 = vsel %vm1483, %v1475, %v1480
    %v1485 = vmul.f32 %v1456, %v1484
    %v1486 = vmul.f32 %v1465, %v1485
    %v1487 = vadd.f32 %v1486, %v1457
    %v1488 = vmax.f32 %v1487, 0.0
    %v1489 = vld [vmem:[%s4] sm:$0xf]
    %v1490 = vld [vmem:[%s4 + $0x4] sm:$0xf]
    %v1491 = vld [vmem:[%s4 + $0x8] sm:$0xf]
    %v1492 = vld [vmem:[%s4 + $0xc] sm:$0xf]
    %v1493 = vld [vmem:[%s4 + $0x10] sm:$0xf]
    %v1494 = vld [vmem:[%s4 + $0x14] sm:$0xf]
    %v1495 = vld [vmem:[%s4 + $0x18] sm:$0xf]
    %v1496 = vld [vmem:[%s4 + $0x1c] sm:$0xf]
    %v1497 = vld [vmem:[%s4 + $0x20] sm:$0xf]
    %v1498 = vld [vmem:[%s4 + $0x24] sm:$0xf]
    %v1499 = vld [vmem:[%s4 + $0x28] sm:$0xf]
    %v1500 = vld [vmem:[%s4 + $0x2c] sm:$0xf]
    %v1501 = vld [vmem:[%s4 + $0x30] sm:$0xf]
    %v1502 = vld [vmem:[%s4 + $0x34] sm:$0xf]
    %v1503 = vld [vmem:[%s4 + $0x38] sm:$0xf]
    %v1504 = vld [vmem:[%s4 + $0x3c] sm:$0xf]
    %v1505 = vpack.c.bf16 %v1488, %v1488
    %v1522 = vunpack.c.l.b16 %v1489
    %v1523 = vunpack.c.l.b16 %v1490
    %v1524 = vunpack.c.l.b16 %v1491
    %v1525 = vunpack.c.l.b16 %v1492
    %v1526 = vunpack.c.l.b16 %v1493
    %v1527 = vunpack.c.l.b16 %v1494
    %v1528 = vunpack.c.l.b16 %v1495
    %v1529 = vunpack.c.l.b16 %v1496
    %v1530 = vunpack.c.l.b16 %v1497
    %v1531 = vunpack.c.l.b16 %v1498
    %v1532 = vunpack.c.l.b16 %v1499
    %v1533 = vunpack.c.l.b16 %v1500
    %v1534 = vunpack.c.l.b16 %v1501
    %v1535 = vunpack.c.l.b16 %v1502
    %v1536 = vunpack.c.l.b16 %v1503
    %v1537 = vunpack.c.l.b16 %v1504
    %v1538 = vpack.c.b16 %v1523, %v1522
    %v1539 = vpack.c.b16 %v1525, %v1524
    %v1540 = vpack.c.b16 %v1527, %v1526
    %v1541 = vpack.c.b16 %v1529, %v1528
    %v1542 = vpack.c.b16 %v1531, %v1530
    %v1543 = vpack.c.b16 %v1533, %v1532
    %v1544 = vpack.c.b16 %v1535, %v1534
    %v1545 = vpack.c.b16 %v1537, %v1536
    %1554 = vmatpush.bf16.msra.mxu0 %v1545
    %1555 = vmatpush.bf16.msra.mxu0 %v1544
    %1556 = vmatpush.bf16.msra.mxu0 %v1543
    %1557 = vmatpush.bf16.msra.mxu0 %v1542
    %1558 = vmatpush.bf16.msra.mxu0 %v1541
    %1559 = vmatpush.bf16.msra.mxu0 %v1540
    %1560 = vmatpush.bf16.msra.mxu0 %v1539
    %1561 = vmatpush.bf16.msra.mxu0 %v1538
    %1562 = vmatmul.bf16.gmra.mxu0 %v1505
    %v1563 = vpop.f32.mrf.mxu0
    %v1564 = vadd.f32 0.0, %v1563
    %v1565 = vpop.f32.mrf.mxu0
    %1566 = vdwg.mxu0
    %v1567 = vld [vmem:[%s6 + $0x4] ss:$0 sm:$0xff]
    %v1568 = vld [vmem:[%s6 + $0x20] ss:$0 sm:$0xff]
    %vm1569 = vcmask 523264
    %v1570 = vsel %vm1569, %v1564, 0.0
    %v1571 = vrot.slane %v1570, 4
    %v1572 = vadd.f32 %v1570, %v1571
    %v1573 = vrot.slane %v1572, 2
    %v1574 = vadd.f32 %v1572, %v1573
    %v1575 = vrot.slane %v1574, 1
    %v1576 = vadd.f32 %v1574, %v1575
    %v1577 = vmul.f32 %v1576, 0.125
    %v1578 = vsub.f32 %v1564, %v1577
    %v1579 = vmul.f32 %v1578, %v1578
    %v1580 = vsel %vm1569, %v1579, 0.0
    %v1581 = vrot.slane %v1580, 4
    %v1582 = vadd.f32 %v1580, %v1581
    %v1583 = vrot.slane %v1582, 2
    %v1584 = vadd.f32 %v1582, %v1583
    %v1585 = vrot.slane %v1584, 1
    %v1586 = vadd.f32 %v1584, %v1585
    %v1587 = vmul.f32 %v1586, 0.125
    %v1588 = vadd.f32 %v1587, 1e-05
    %v1589 = vrsqrt.pop %v1588
    %v1590 = vmul.f32 %v1589, %v1588
    %v1591 = vmul.f32 %v1590, %v1589
    %v1592 = vmul.f32 0.5, %v1591
    %v1593 = vsub.f32 1.5, %v1592
    %v1594 = vmul.f32 %v1589, %v1593
    %vm1595 = vweird.f32 %v1588
    %vm1596 = vweird.f32 %v1589
    %vm1597 = vmor %vm1595, %vm1596
    %v1598 = vsel %vm1597, %v1589, %v1594
    %v1599 = vmul.f32 %v1567, %v1598
    %v1600 = vmul.f32 %v1578, %v1599
    %v1601 = vadd.f32 %v1600, %v1568
    %v1602 = vmax.f32 %v1601, 0.0
    %v1603 = vld [vmem:[%s6] ss:$0 sm:$0xff]
    %v1604 = vld [vmem:[%s5] sm:$0xf]
    %v1605 = vld [vmem:[%s5 + $0x4] sm:$0xf]
    %v1606 = vld [vmem:[%s5 + $0x8] sm:$0xf]
    %v1607 = vld [vmem:[%s5 + $0xc] sm:$0xf]
    %v1608 = vld [vmem:[%s5 + $0x10] sm:$0xf]
    %v1609 = vld [vmem:[%s5 + $0x14] sm:$0xf]
    %v1610 = vld [vmem:[%s5 + $0x18] sm:$0xf]
    %v1611 = vld [vmem:[%s5 + $0x1c] sm:$0xf]
    %v1612 = vpack.c.bf16 %v1602, %v1602
    %v1621 = vunpack.c.l.b16 %v1604
    %v1622 = vunpack.c.l.b16 %v1605
    %v1623 = vunpack.c.l.b16 %v1606
    %v1624 = vunpack.c.l.b16 %v1607
    %v1625 = vunpack.c.l.b16 %v1608
    %v1626 = vunpack.c.l.b16 %v1609
    %v1627 = vunpack.c.l.b16 %v1610
    %v1628 = vunpack.c.l.b16 %v1611
    %v1629 = vpack.c.b16 %v1622, %v1621
    %v1630 = vpack.c.b16 %v1624, %v1623
    %v1631 = vpack.c.b16 %v1626, %v1625
    %v1632 = vpack.c.b16 %v1628, %v1627
    %v1638 = vsel %vm1569, %v1612, 0
    %1640 = vmatpush.bf16.msra.mxu0 0
    %1641 = vmatpush.bf16.msra.mxu0 0
    %1642 = vmatpush.bf16.msra.mxu0 0
    %1643 = vmatpush.bf16.msra.mxu0 0
    %1644 = vmatpush.bf16.msra.mxu0 %v1632
    %1645 = vmatpush.bf16.msra.mxu0 %v1631
    %1646 = vmatpush.bf16.msra.mxu0 %v1630
    %1647 = vmatpush.bf16.msra.mxu0 %v1629
    %1648 = vmatmul.bf16.gmra.mxu0 %v1638
    %v1649 = vpop.f32.mrf.mxu0
    %v1650 = vadd.f32 %v1603, %v1649
    %v1651 = vpop.f32.mrf.mxu0
    %1652 = vdwg.mxu0
    %1653 = vst [vmem:[#allocation8] sm:$0xff] %v1650
    // Predicated region
    $region42: #{mlp_head_forward.1} parent=1 // pred_check
      _
    $region43: #{mlp_head_forward.1} parent=1 // pred_check_branch
      %1655 = sbr.rel (0) target = $region45
    $region44: #{mlp_head_forward.1} parent=1 // pred_region
      %1657 = vsyncadd [#allocation4], 0
      %s1659 = sshll.u32 [#allocation8], 4
      %s1660 = int_to_ptr.vmem [resolvable:$true] %s1659
      %s1661 = sshll.u32 %s7, 4
      %s1662 = int_to_ptr.hbm [resolvable:$true] %s1661
      %1664 = dma.vmem_to_hbm [thread:$0]  %s1660, 128, %s1662, [#allocation4]
    $region45: #{mlp_head_forward.1} parent=1 // pred_fallthru
      _
    // Predicated region
    $region46: #{mlp_head_forward.1} parent=1 // pred_check
      _
    $region47: #{mlp_head_forward.1} parent=1 // pred_check_branch
      %1666 = sbr.rel (0) target = $region49
    $region48: #{mlp_head_forward.1} parent=1 // pred_region
      %1668 = dma.done [#allocation4], 128
    $region49: #{mlp_head_forward.1} parent=1 // pred_fallthru
      _
    %1669 = vsyncpa [#allocation3], 1
    %1670 = vsyncpa [#allocation6], 1
    %1671 = vsyncpa [#allocation4], 1

</llo_original>
